<compile_context>
chip_gen: v5e
topology: v5e:2x2
jax: 0.10.0
libtpu: 0.0.40
codegen_flags: <defaults>
</compile_context>

<pallas_src>
import math
from functools import partial

import jax
import jax.numpy as jnp
from jax import lax
from jax.experimental import pallas as pl
from jax.experimental.pallas import tpu as pltpu


# ----------------------------------------------------------------------------
# RoPE table precompute (pure JAX equivalent of precompute_rope_params,
# including the optional Llama3 freq_config rescaling path).
# ----------------------------------------------------------------------------
def precompute_rope_params(head_dim, theta_base=10000.0, context_length=4096,
                           freq_config=None):
    assert head_dim % 2 == 0, "Embedding dimension must be even"
    inv_freq = 1.0 / theta_base ** (
        jnp.arange(0, head_dim, 2, dtype=jnp.float32) / head_dim
    )
    if freq_config is not None:
        low_freq_wavelen = freq_config["original_context_length"] / freq_config["low_freq_factor"]
        high_freq_wavelen = freq_config["original_context_length"] / freq_config["high_freq_factor"]
        wavelen = 2.0 * jnp.pi / inv_freq
        inv_freq_adj = jnp.where(wavelen > low_freq_wavelen,
                                 inv_freq / freq_config["factor"], inv_freq)
        smooth = (freq_config["original_context_length"] / wavelen
                  - freq_config["low_freq_factor"]) / (
                      freq_config["high_freq_factor"] - freq_config["low_freq_factor"])
        smoothed = (1.0 - smooth) * (inv_freq / freq_config["factor"]) + smooth * inv_freq
        is_medium = (wavelen <= low_freq_wavelen) & (wavelen >= high_freq_wavelen)
        inv_freq = jnp.where(is_medium, smoothed, inv_freq_adj)
    positions = jnp.arange(context_length, dtype=jnp.float32)
    angles = positions[:, None] * inv_freq[None, :]                 # (ctx, hd//2)
    angles = jnp.concatenate([angles, angles], axis=1)              # (ctx, hd)
    return jnp.cos(angles), jnp.sin(angles)


# ----------------------------------------------------------------------------
# Pallas kernel: one grid step = (batch element, q tile).
# ----------------------------------------------------------------------------
def gqa_kernel(x_q_ref, x_kv_ref, wq_ref, wk_ref, wv_ref, wo_ref,
               cos_ref, sin_ref,
               o_ref,
               k_scr, v_scr, ctx_scr, m_scr, l_scr, acc_scr,
               *, num_heads, num_kv_groups, head_dim, kv_tile, mxu_dtype):
    TQ = x_q_ref.shape[0]           # q rows handled by this grid step
    T = x_kv_ref.shape[0]           # full sequence length (keys / values)
    TK = kv_tile
    half = head_dim // 2
    gs = num_heads // num_kv_groups
    num_kv_tiles = T // TK
    scale = 1.0 / math.sqrt(head_dim)

    qt = pl.program_id(1)
    q_start = pl.multiple_of(qt * TQ, TQ)   # global row offset of this q tile

    # --- RoPE helpers (f32).  Sign of rotate-half is folded into sin (wrapper). ---
    def rolled_half(t):
        if head_dim % 128 == 0:
            return pltpu.roll(t, shift=half, axis=-1)       # XLU slot, ~free
        return jnp.concatenate([t[:, half:], t[:, :half]], axis=-1)

    def rope(t, c, s_signed):
        return t * c + rolled_half(t) * s_signed

    # ------------------------------------------------------------------
    # q-tile 0: project K / V for the whole sequence once per batch element,
    # apply RoPE to K and park both (bf16) in persistent VMEM scratch.  Reused
    # by every subsequent q tile of this batch element (qt axis = "arbitrary").
    # ------------------------------------------------------------------
    @pl.when(qt == 0)
    def _():
        x_full = x_kv_ref[...]                                       # (T, d_in) bf16
        k_all = jnp.dot(x_full, wk_ref[...], preferred_element_type=jnp.float32)
        v_all = jnp.dot(x_full, wv_ref[...], preferred_element_type=jnp.float32)
        cos_f = cos_ref[...]
        sin_f = sin_ref[...]
        for g in range(num_kv_groups):
            k_g = rope(k_all[:, g * head_dim:(g + 1) * head_dim], cos_f, sin_f)
            k_scr[:, g * head_dim:(g + 1) * head_dim] = k_g.astype(mxu_dtype)
        v_scr[...] = v_all.astype(mxu_dtype)

    # ------------------------------------------------------------------
    # Q projection + RoPE for this q tile (softmax scale folded into Q).
    # ------------------------------------------------------------------
    x_q = x_q_ref[...]                                               # (TQ, d_in) bf16
    q_all = jnp.dot(x_q, wq_ref[...], preferred_element_type=jnp.float32)   # (TQ, H*hd)
    cos_q = cos_ref[pl.ds(q_start, TQ), :]                           # (TQ, hd) f32
    sin_q = sin_ref[pl.ds(q_start, TQ), :]

    # Relative (col - row) offsets, hoisted once per grid step; the per-kv-tile
    # causal bias is then a single compare against a dynamic scalar.
    rows_local = lax.broadcasted_iota(jnp.int32, (gs, TQ, TK), 1).reshape(gs * TQ, TK)
    cols_local = lax.broadcasted_iota(jnp.int32, (gs * TQ, TK), 1)
    delta = cols_local - rows_local                                  # (gs*TQ, TK) i32

    # ------------------------------------------------------------------
    # Per-group attention: stack the group's heads along rows so each
    # (group, kv-tile) pair is one scores matmul and one p@V matmul.
    # ------------------------------------------------------------------
    for g in range(num_kv_groups):
        q_heads = []
        for hl in range(gs):
            h = g * gs + hl                                          # repeat_interleave
            q_h = rope(q_all[:, h * head_dim:(h + 1) * head_dim], cos_q, sin_q)
            q_heads.append((q_h * scale).astype(mxu_dtype))          # fold 1/sqrt(hd)
        q_g = jnp.concatenate(q_heads, axis=0)                       # (gs*TQ, hd)

        # online-softmax carries
        m_scr[...] = jnp.full(m_scr.shape, -1e30, jnp.float32)
        l_scr[...] = jnp.zeros(l_scr.shape, jnp.float32)
        acc_scr[...] = jnp.zeros(acc_scr.shape, jnp.float32)

        for kt in range(num_kv_tiles):
            kv_start = kt * TK                                       # static

            @pl.when(kv_start <= q_start + (TQ - 1))                 # causal tile skip
            def _():
                k_t = k_scr[kv_start:kv_start + TK, g * head_dim:(g + 1) * head_dim]
                v_t = v_scr[kv_start:kv_start + TK, g * head_dim:(g + 1) * head_dim]
                # q @ k^T without materializing a transpose: contract last dims.
                # TODO(synk): confirm via bundle dump that this does not emit a
                # per-tile vxpose; if it does, transpose K once per group instead.
                s = lax.dot_general(q_g, k_t,
                                    dimension_numbers=(((1,), (1,)), ((), ())),
                                    preferred_element_type=jnp.float32)  # (gs*TQ, TK)
                s = s + jnp.where(delta > (q_start - kv_start),
                                  jnp.float32(-1e30), jnp.float32(0.0))
                m_prev = m_scr[...]
                m_new = jnp.maximum(m_prev, jnp.max(s, axis=-1, keepdims=True))
                alpha = jnp.exp(m_prev - m_new)
                p = jnp.exp(s - m_new)
                l_scr[...] = alpha * l_scr[...] + jnp.sum(p, axis=-1, keepdims=True)
                acc_scr[...] = alpha * acc_scr[...] + jnp.dot(
                    p.astype(mxu_dtype), v_t, preferred_element_type=jnp.float32)
                m_scr[...] = m_new

        ctx_g = acc_scr[...] * pl.reciprocal(l_scr[...], approx=True)  # (gs*TQ, hd) f32
        for hl in range(gs):
            h = g * gs + hl
            ctx_scr[:, h * head_dim:(h + 1) * head_dim] = (
                ctx_g[hl * TQ:(hl + 1) * TQ, :].astype(ctx_scr.dtype))

    # --- output projection ---
    out = jnp.dot(ctx_scr[...], wo_ref[...], preferred_element_type=jnp.float32)
    o_ref[...] = out.astype(o_ref.dtype)


# ----------------------------------------------------------------------------
# Wrapper
# ----------------------------------------------------------------------------
def grouped_query_attention(x, wq, wk, wv, wo, cos, sin,
                            num_heads, num_kv_groups,
                            q_tile=None, kv_tile=None, mxu_dtype=jnp.bfloat16):
    B, T, d_in = x.shape
    d_out = wq.shape[0]
    assert d_out % num_heads == 0 and num_heads % num_kv_groups == 0
    head_dim = d_out // num_heads
    kv_dim = num_kv_groups * head_dim
    gs = num_heads // num_kv_groups
    half = head_dim // 2

    def _pick_tile(n, cap=256):
        # largest divisor of n that is <= cap (keeps >=2 grid steps at long T
        # so the output-writeback pipeline has something to overlap with).
        t = min(n, cap)
        while n % t:
            t -= 1
        return t

    TQ = _pick_tile(T) if q_tile is None else q_tile
    assert T % TQ == 0, "q_tile must divide the sequence length"
    TK = TQ if kv_tile is None else kv_tile
    assert T % TK == 0, "kv_tile must divide the sequence length"
    num_q_tiles = T // TQ
    out_dtype = x.dtype

    # One-time dtype / layout prep (fuses into the feed under jit):
    x_bf = x.astype(mxu_dtype)          # halve HBM->VMEM bytes for x blocks
    wq_t = wq.T.astype(mxu_dtype)       # (d_in,  d_out)
    wk_t = wk.T.astype(mxu_dtype)       # (d_in,  kv_dim)
    wv_t = wv.T.astype(mxu_dtype)       # (d_in,  kv_dim)
    wo_t = wo.T.astype(mxu_dtype)       # (d_out, d_out)

    cos_t = cos[:T].astype(jnp.float32)                             # (T, hd) f32
    sin_f = sin[:T].astype(jnp.float32)
    # Fold the rotate-half sign into sin: rope = t*cos + roll(t, half)*sin_signed
    sin_signed = jnp.concatenate([-sin_f[:, :half], sin_f[:, half:]], axis=1)

    kernel = partial(gqa_kernel,
                     num_heads=num_heads,
                     num_kv_groups=num_kv_groups,
                     head_dim=head_dim,
                     kv_tile=TK,
                     mxu_dtype=mxu_dtype)

    # Generation-aware VMEM budget: ~100 MiB on 128-MiB parts, ~40 MiB on v7x.
    try:
        vmem_cap = int(pltpu.get_tpu_info().vmem_capacity_bytes)
    except Exception:
        vmem_cap = 64 * 1024 * 1024
    vmem_limit = int(max(32 * 1024 * 1024,
                         min(vmem_cap - 24 * 1024 * 1024, 100 * 1024 * 1024)))

    return pl.pallas_call(
        kernel,
        out_shape=jax.ShapeDtypeStruct((B, T, d_out), out_dtype),
        grid=(B, num_q_tiles),
        in_specs=[
            # q-tile rows of x delivered as their own block (avoids an in-kernel
            # dynamic sublane slice of a packed bf16 block).
            pl.BlockSpec((None, TQ, d_in), lambda b, qt: (b, qt, 0)),   # x rows for Q
            pl.BlockSpec((None, T, d_in), lambda b, qt: (b, 0, 0)),     # x full for K/V
            pl.BlockSpec((d_in, d_out), lambda b, qt: (0, 0)),          # W_query^T
            pl.BlockSpec((d_in, kv_dim), lambda b, qt: (0, 0)),         # W_key^T
            pl.BlockSpec((d_in, kv_dim), lambda b, qt: (0, 0)),         # W_value^T
            pl.BlockSpec((d_out, d_out), lambda b, qt: (0, 0)),         # out_proj^T
            pl.BlockSpec((T, head_dim), lambda b, qt: (0, 0)),          # cos (full T)
            pl.BlockSpec((T, head_dim), lambda b, qt: (0, 0)),          # sin (signed)
        ],
        out_specs=pl.BlockSpec((None, TQ, d_out), lambda b, qt: (b, qt, 0)),
        scratch_shapes=[
            pltpu.VMEM((T, kv_dim), mxu_dtype),            # rope'd K cache (persists)
            pltpu.VMEM((T, kv_dim), mxu_dtype),            # V cache (persists)
            pltpu.VMEM((TQ, d_out), mxu_dtype),            # per-tile context (bf16)
            pltpu.VMEM((gs * TQ, 1), jnp.float32),         # online-softmax m
            pltpu.VMEM((gs * TQ, 1), jnp.float32),         # online-softmax l
            pltpu.VMEM((gs * TQ, head_dim), jnp.float32),  # online-softmax acc
        ],
        compiler_params=pltpu.CompilerParams(
            # qt axis must be "arbitrary": K/V scratch filled at qt==0 is reused
            # by later q tiles of the same batch element.
            dimension_semantics=("parallel", "arbitrary"),
            vmem_limit_bytes=vmem_limit),
    )(x_bf, x_bf, wq_t, wk_t, wv_t, wo_t, cos_t, sin_signed)


# ----------------------------------------------------------------------------
# Pure-JAX reference (mirrors the PyTorch forward, f32) for verification.
# ----------------------------------------------------------------------------
def reference_gqa(x, wq, wk, wv, wo, cos, sin, num_heads, num_kv_groups):
    B, T, _ = x.shape
    d_out = wq.shape[0]
    head_dim = d_out // num_heads
    group_size = num_heads // num_kv_groups

    def rope(t):  # t: (B, H, T, hd)
        half = head_dim // 2
        c = cos[:T][None, None]
        s = sin[:T][None, None]
        t1, t2 = t[..., :half], t[..., half:]
        rotated = jnp.concatenate([-t2, t1], axis=-1)
        return t * c + rotated * s

    q = (x @ wq.T).reshape(B, T, num_heads, head_dim).transpose(0, 2, 1, 3)
    k = (x @ wk.T).reshape(B, T, num_kv_groups, head_dim).transpose(0, 2, 1, 3)
    v = (x @ wv.T).reshape(B, T, num_kv_groups, head_dim).transpose(0, 2, 1, 3)
    q, k = rope(q), rope(k)
    k = jnp.repeat(k, group_size, axis=1)
    v = jnp.repeat(v, group_size, axis=1)
    scores = jnp.einsum("bhqd,bhkd->bhqk", q, k) / math.sqrt(head_dim)
    mask = jnp.triu(jnp.ones((T, T), dtype=bool), k=1)
    scores = jnp.where(mask[None, None], -jnp.inf, scores)
    w = jax.nn.softmax(scores, axis=-1)
    ctx = jnp.einsum("bhqk,bhkd->bhqd", w, v).transpose(0, 2, 1, 3).reshape(B, T, d_out)
    return ctx @ wo.T


# ----------------------------------------------------------------------------
if __name__ == "__main__":
    # Small, module-consistent shapes (exercises q tiling, KV-tile skipping and
    # the grouped / stacked-head path: 2 q tiles, 2 kv tiles, 2 heads per group).
    B, T = 2, 16
    d_in, d_out = 32, 32
    num_heads, num_kv_groups = 4, 2
    head_dim = d_out // num_heads          # 8
    context_length = 32
    rope_base = 10000.0
    TQ = 8                                  # q tile -> grid (B, 2)

    key = jax.random.PRNGKey(0)
    kx, kq, kk, kv, ko = jax.random.split(key, 5)
    x = jax.random.normal(kx, (B, T, d_in), dtype=jnp.float32)
    wq = jax.random.normal(kq, (d_out, d_in), dtype=jnp.float32) * 0.05
    wk = jax.random.normal(kk, (num_kv_groups * head_dim, d_in), dtype=jnp.float32) * 0.05
    wv = jax.random.normal(kv, (num_kv_groups * head_dim, d_in), dtype=jnp.float32) * 0.05
    wo = jax.random.normal(ko, (d_out, d_out), dtype=jnp.float32) * 0.05

    cos, sin = precompute_rope_params(head_dim, rope_base, context_length)

    gqa = jax.jit(partial(grouped_query_attention,
                          num_heads=num_heads, num_kv_groups=num_kv_groups,
                          q_tile=TQ))
    out = gqa(x, wq, wk, wv, wo, cos, sin)
    out = jax.block_until_ready(out)

    ref = reference_gqa(x, wq, wk, wv, wo, cos, sin, num_heads, num_kv_groups)
    assert out.shape == (B, T, d_out)
    max_err = float(jnp.max(jnp.abs(out - ref)))
    # bf16 MXU operands + approx reciprocal vs. f32 reference -> relaxed tol.
    assert jnp.allclose(out, ref, atol=2e-2, rtol=2e-2), \
        f"mismatch vs reference (max err {max_err})"

    print("KERNEL_OK")
</pallas_src>

<mosaic_0001>
module attributes {stable_mosaic.version = 11 : i64} {
  func.func @gqa_kernel(%arg0: i32, %arg1: i32, %arg2: memref<1x8x32xbf16, #tpu.memory_space<vmem>>, %arg3: memref<1x16x32xbf16, #tpu.memory_space<vmem>>, %arg4: memref<32x32xbf16, #tpu.memory_space<vmem>>, %arg5: memref<32x16xbf16, #tpu.memory_space<vmem>>, %arg6: memref<32x16xbf16, #tpu.memory_space<vmem>>, %arg7: memref<32x32xbf16, #tpu.memory_space<vmem>>, %arg8: memref<16x8xf32, #tpu.memory_space<vmem>>, %arg9: memref<16x8xf32, #tpu.memory_space<vmem>>, %arg10: memref<1x8x32xf32, #tpu.memory_space<vmem>>, %arg11: memref<16x16xbf16, #tpu.memory_space<vmem>>, %arg12: memref<16x16xbf16, #tpu.memory_space<vmem>>, %arg13: memref<8x32xbf16, #tpu.memory_space<vmem>>, %arg14: memref<16x1xf32, #tpu.memory_space<vmem>>, %arg15: memref<16x1xf32, #tpu.memory_space<vmem>>, %arg16: memref<16x8xf32, #tpu.memory_space<vmem>>) attributes {dimension_semantics = [#tpu.dimension_semantics<parallel>, #tpu.dimension_semantics<arbitrary>], iteration_bounds = array<i64: 2, 2>, scalar_prefetch = 0 : i64, scratch_operands = 6 : i64, tpu.core_type = #tpu.core_type<tc>, window_params = [{transform_indices = @transform_0, window_bounds = array<i64: 1, 8, 32>}, {transform_indices = @transform_1, window_bounds = array<i64: 1, 16, 32>}, {pipeline_mode = #tpu.pipeline_mode<synchronous>, transform_indices = @transform_2, window_bounds = array<i64: 32, 32>}, {pipeline_mode = #tpu.pipeline_mode<synchronous>, transform_indices = @transform_3, window_bounds = array<i64: 32, 16>}, {pipeline_mode = #tpu.pipeline_mode<synchronous>, transform_indices = @transform_4, window_bounds = array<i64: 32, 16>}, {pipeline_mode = #tpu.pipeline_mode<synchronous>, transform_indices = @transform_5, window_bounds = array<i64: 32, 32>}, {pipeline_mode = #tpu.pipeline_mode<synchronous>, transform_indices = @transform_6, window_bounds = array<i64: 16, 8>}, {pipeline_mode = #tpu.pipeline_mode<synchronous>, transform_indices = @transform_7, window_bounds = array<i64: 16, 8>}, {transform_indices = @transform_8, window_bounds = array<i64: 1, 8, 32>}]} {
    %c8_i32 = arith.constant 8 : i32
    %0 = arith.muli %arg1, %c8_i32 : i32
    %1 = tpu.assume_multiple %0, 8 : i32
    %c0_i32 = arith.constant 0 : i32
    %2 = arith.cmpi eq, %arg1, %c0_i32 : i32
    %3 = arith.extui %2 : i1 to i32
    %c0_i32_0 = arith.constant 0 : i32
    %4 = arith.cmpi ne, %3, %c0_i32_0 : i32
    scf.if %4 {
      %c0_61 = arith.constant 0 : index
      %c0_62 = arith.constant 0 : index
      %c0_63 = arith.constant 0 : index
      %115 = vector.load %arg3[%c0_61, %c0_62, %c0_63] : memref<1x16x32xbf16, #tpu.memory_space<vmem>>, vector<1x16x32xbf16>
      %116 = vector.shape_cast %115 : vector<1x16x32xbf16> to vector<16x32xbf16>
      %c0_64 = arith.constant 0 : index
      %c0_65 = arith.constant 0 : index
      %117 = vector.load %arg5[%c0_64, %c0_65] : memref<32x16xbf16, #tpu.memory_space<vmem>>, vector<32x16xbf16>
      %cst_66 = arith.constant dense<0.000000e+00> : vector<16x16xf32>
      %118 = tpu.matmul %116, %117, %cst_66 {dimension_numbers = #tpu.dot_dimension_numbers<[1], [0], [0], [1], [0, 0, 1, 1], [], []>} : vector<16x32xbf16>, vector<32x16xbf16>, vector<16x16xf32> -> vector<16x16xf32>
      %c0_67 = arith.constant 0 : index
      %c0_68 = arith.constant 0 : index
      %119 = vector.load %arg6[%c0_67, %c0_68] : memref<32x16xbf16, #tpu.memory_space<vmem>>, vector<32x16xbf16>
      %cst_69 = arith.constant dense<0.000000e+00> : vector<16x16xf32>
      %120 = tpu.matmul %116, %119, %cst_69 {dimension_numbers = #tpu.dot_dimension_numbers<[1], [0], [0], [1], [0, 0, 1, 1], [], []>} : vector<16x32xbf16>, vector<32x16xbf16>, vector<16x16xf32> -> vector<16x16xf32>
      %c0_70 = arith.constant 0 : index
      %c0_71 = arith.constant 0 : index
      %121 = vector.load %arg8[%c0_70, %c0_71] : memref<16x8xf32, #tpu.memory_space<vmem>>, vector<16x8xf32>
      %c0_72 = arith.constant 0 : index
      %c0_73 = arith.constant 0 : index
      %122 = vector.load %arg9[%c0_72, %c0_73] : memref<16x8xf32, #tpu.memory_space<vmem>>, vector<16x8xf32>
      %123 = vector.extract_strided_slice %118 {offsets = [0, 0], sizes = [16, 8], strides = [1, 1]} : vector<16x16xf32> to vector<16x8xf32>
      %124 = arith.mulf %123, %121 : vector<16x8xf32>
      %125 = vector.extract_strided_slice %123 {offsets = [0, 4], sizes = [16, 4], strides = [1, 1]} : vector<16x8xf32> to vector<16x4xf32>
      %126 = vector.extract_strided_slice %123 {offsets = [0, 0], sizes = [16, 4], strides = [1, 1]} : vector<16x8xf32> to vector<16x4xf32>
      %127 = tpu.concatenate %125, %126 in 1 : vector<16x4xf32>, vector<16x4xf32> -> vector<16x8xf32>
      %128 = arith.mulf %127, %122 : vector<16x8xf32>
      %129 = arith.addf %124, %128 : vector<16x8xf32>
      %130 = arith.truncf %129 : vector<16x8xf32> to vector<16x8xbf16>
      %c0_74 = arith.constant 0 : index
      %c0_75 = arith.constant 0 : index
      %131 = vector.load %arg11[%c0_74, %c0_75] : memref<16x16xbf16, #tpu.memory_space<vmem>>, vector<16x8xbf16>
      tpu.vector_store %arg11[%c0_74, %c0_75], %130 {strides = array<i32>} : memref<16x16xbf16, #tpu.memory_space<vmem>>, vector<16x8xbf16>,
      %132 = vector.extract_strided_slice %118 {offsets = [0, 8], sizes = [16, 8], strides = [1, 1]} : vector<16x16xf32> to vector<16x8xf32>
      %133 = arith.mulf %132, %121 : vector<16x8xf32>
      %134 = vector.extract_strided_slice %132 {offsets = [0, 4], sizes = [16, 4], strides = [1, 1]} : vector<16x8xf32> to vector<16x4xf32>
      %135 = vector.extract_strided_slice %132 {offsets = [0, 0], sizes = [16, 4], strides = [1, 1]} : vector<16x8xf32> to vector<16x4xf32>
      %136 = tpu.concatenate %134, %135 in 1 : vector<16x4xf32>, vector<16x4xf32> -> vector<16x8xf32>
      %137 = arith.mulf %136, %122 : vector<16x8xf32>
      %138 = arith.addf %133, %137 : vector<16x8xf32>
      %139 = arith.truncf %138 : vector<16x8xf32> to vector<16x8xbf16>
      %c0_76 = arith.constant 0 : index
      %c8_77 = arith.constant 8 : index
      %140 = vector.load %arg11[%c0_76, %c8_77] : memref<16x16xbf16, #tpu.memory_space<vmem>>, vector<16x8xbf16>
      tpu.vector_store %arg11[%c0_76, %c8_77], %139 {strides = array<i32>} : memref<16x16xbf16, #tpu.memory_space<vmem>>, vector<16x8xbf16>,
      %141 = arith.truncf %120 : vector<16x16xf32> to vector<16x16xbf16>
      %c0_78 = arith.constant 0 : index
      %c0_79 = arith.constant 0 : index
      %142 = vector.load %arg12[%c0_78, %c0_79] : memref<16x16xbf16, #tpu.memory_space<vmem>>, vector<16x16xbf16>
      tpu.vector_store %arg12[%c0_78, %c0_79], %141 {strides = array<i32>} : memref<16x16xbf16, #tpu.memory_space<vmem>>, vector<16x16xbf16>,
    } else {
    }
    %c0 = arith.constant 0 : index
    %c0_1 = arith.constant 0 : index
    %c0_2 = arith.constant 0 : index
    %5 = vector.load %arg2[%c0, %c0_1, %c0_2] : memref<1x8x32xbf16, #tpu.memory_space<vmem>>, vector<1x8x32xbf16>
    %6 = vector.shape_cast %5 : vector<1x8x32xbf16> to vector<8x32xbf16>
    %c0_3 = arith.constant 0 : index
    %c0_4 = arith.constant 0 : index
    %7 = vector.load %arg4[%c0_3, %c0_4] : memref<32x32xbf16, #tpu.memory_space<vmem>>, vector<32x32xbf16>
    %cst = arith.constant dense<0.000000e+00> : vector<8x32xf32>
    %8 = tpu.matmul %6, %7, %cst {dimension_numbers = #tpu.dot_dimension_numbers<[1], [0], [0], [1], [0, 0, 1, 1], [], []>} : vector<8x32xbf16>, vector<32x32xbf16>, vector<8x32xf32> -> vector<8x32xf32>
    %9 = arith.index_cast %1 : i32 to index
    %c0_5 = arith.constant 0 : index
    %10 = vector.load %arg8[%9, %c0_5] : memref<16x8xf32, #tpu.memory_space<vmem>>, vector<8x8xf32>
    %11 = arith.index_cast %1 : i32 to index
    %c0_6 = arith.constant 0 : index
    %12 = vector.load %arg9[%11, %c0_6] : memref<16x8xf32, #tpu.memory_space<vmem>>, vector<8x8xf32>
    %13 = tpu.iota {dimensions = array<i32: 1>} : vector<2x8x8xi32>
    %14 = vector.shape_cast %13 : vector<2x8x8xi32> to vector<16x8xi32>
    %15 = tpu.iota {dimensions = array<i32: 1>} : vector<16x8xi32>
    %16 = arith.subi %15, %14 : vector<16x8xi32>
    %17 = vector.extract_strided_slice %8 {offsets = [0, 0], sizes = [8, 8], strides = [1, 1]} : vector<8x32xf32> to vector<8x8xf32>
    %18 = arith.mulf %17, %10 : vector<8x8xf32>
    %19 = vector.extract_strided_slice %17 {offsets = [0, 4], sizes = [8, 4], strides = [1, 1]} : vector<8x8xf32> to vector<8x4xf32>
    %20 = vector.extract_strided_slice %17 {offsets = [0, 0], sizes = [8, 4], strides = [1, 1]} : vector<8x8xf32> to vector<8x4xf32>
    %21 = tpu.concatenate %19, %20 in 1 : vector<8x4xf32>, vector<8x4xf32> -> vector<8x8xf32>
    %22 = arith.mulf %21, %12 : vector<8x8xf32>
    %23 = arith.addf %18, %22 : vector<8x8xf32>
    %cst_7 = arith.constant 0.353553385 : f32
    %24 = vector.broadcast %cst_7 : f32 to vector<8x8xf32>
    %25 = arith.mulf %23, %24 : vector<8x8xf32>
    %26 = arith.truncf %25 : vector<8x8xf32> to vector<8x8xbf16>
    %27 = vector.extract_strided_slice %8 {offsets = [0, 8], sizes = [8, 8], strides = [1, 1]} : vector<8x32xf32> to vector<8x8xf32>
    %28 = arith.mulf %27, %10 : vector<8x8xf32>
    %29 = vector.extract_strided_slice %27 {offsets = [0, 4], sizes = [8, 4], strides = [1, 1]} : vector<8x8xf32> to vector<8x4xf32>
    %30 = vector.extract_strided_slice %27 {offsets = [0, 0], sizes = [8, 4], strides = [1, 1]} : vector<8x8xf32> to vector<8x4xf32>
    %31 = tpu.concatenate %29, %30 in 1 : vector<8x4xf32>, vector<8x4xf32> -> vector<8x8xf32>
    %32 = arith.mulf %31, %12 : vector<8x8xf32>
    %33 = arith.addf %28, %32 : vector<8x8xf32>
    %cst_8 = arith.constant 0.353553385 : f32
    %34 = vector.broadcast %cst_8 : f32 to vector<8x8xf32>
    %35 = arith.mulf %33, %34 : vector<8x8xf32>
    %36 = arith.truncf %35 : vector<8x8xf32> to vector<8x8xbf16>
    %37 = tpu.concatenate %26, %36 in 0 : vector<8x8xbf16>, vector<8x8xbf16> -> vector<16x8xbf16>
    %cst_9 = arith.constant -1.000000e+30 : f32
    %38 = vector.broadcast %cst_9 : f32 to vector<16x1xf32>
    %c0_10 = arith.constant 0 : index
    %c0_11 = arith.constant 0 : index
    %39 = vector.load %arg14[%c0_10, %c0_11] : memref<16x1xf32, #tpu.memory_space<vmem>>, vector<16x1xf32>
    tpu.vector_store %arg14[%c0_10, %c0_11], %38 {strides = array<i32>} : memref<16x1xf32, #tpu.memory_space<vmem>>, vector<16x1xf32>,
    %cst_12 = arith.constant 0.000000e+00 : f32
    %40 = vector.broadcast %cst_12 : f32 to vector<16x1xf32>
    %c0_13 = arith.constant 0 : index
    %c0_14 = arith.constant 0 : index
    %41 = vector.load %arg15[%c0_13, %c0_14] : memref<16x1xf32, #tpu.memory_space<vmem>>, vector<16x1xf32>
    tpu.vector_store %arg15[%c0_13, %c0_14], %40 {strides = array<i32>} : memref<16x1xf32, #tpu.memory_space<vmem>>, vector<16x1xf32>,
    %cst_15 = arith.constant 0.000000e+00 : f32
    %42 = vector.broadcast %cst_15 : f32 to vector<16x8xf32>
    %c0_16 = arith.constant 0 : index
    %c0_17 = arith.constant 0 : index
    %43 = vector.load %arg16[%c0_16, %c0_17] : memref<16x8xf32, #tpu.memory_space<vmem>>, vector<16x8xf32>
    tpu.vector_store %arg16[%c0_16, %c0_17], %42 {strides = array<i32>} : memref<16x8xf32, #tpu.memory_space<vmem>>, vector<16x8xf32>,
    %c7_i32 = arith.constant 7 : i32
    %44 = arith.addi %1, %c7_i32 : i32
    %c0_i32_18 = arith.constant 0 : i32
    %45 = arith.cmpi sge, %44, %c0_i32_18 : i32
    %46 = arith.extui %45 : i1 to i32
    %c0_i32_19 = arith.constant 0 : i32
    %47 = arith.cmpi ne, %46, %c0_i32_19 : i32
    scf.if %47 {
      %c0_61 = arith.constant 0 : index
      %c0_62 = arith.constant 0 : index
      %115 = vector.load %arg11[%c0_61, %c0_62] : memref<16x16xbf16, #tpu.memory_space<vmem>>, vector<8x8xbf16>
      %c0_63 = arith.constant 0 : index
      %c0_64 = arith.constant 0 : index
      %116 = vector.load %arg12[%c0_63, %c0_64] : memref<16x16xbf16, #tpu.memory_space<vmem>>, vector<8x8xbf16>
      %cst_65 = arith.constant dense<0.000000e+00> : vector<16x8xf32>
      %117 = tpu.matmul %37, %115, %cst_65 {dimension_numbers = #tpu.dot_dimension_numbers<[1], [1], [0], [0], [0, 0, 1, 0], [], []>} : vector<16x8xbf16>, vector<8x8xbf16>, vector<16x8xf32> -> vector<16x8xf32>
      %c0_i32_66 = arith.constant 0 : i32
      %118 = arith.subi %1, %c0_i32_66 : i32
      %119 = vector.broadcast %118 : i32 to vector<16x8xi32>
      %120 = arith.cmpi sgt, %16, %119 : vector<16x8xi32>
      %cst_67 = arith.constant -1.000000e+30 : f32
      %cst_68 = arith.constant 0.000000e+00 : f32
      %121 = vector.broadcast %cst_67 : f32 to vector<16x8xf32>
      %122 = vector.broadcast %cst_68 : f32 to vector<16x8xf32>
      %123 = arith.select %120, %121, %122 : vector<16x8xi1>, vector<16x8xf32>
      %124 = arith.addf %117, %123 : vector<16x8xf32>
      %c0_69 = arith.constant 0 : index
      %c0_70 = arith.constant 0 : index
      %125 = vector.load %arg14[%c0_69, %c0_70] : memref<16x1xf32, #tpu.memory_space<vmem>>, vector<16x1xf32>
      %cst_71 = arith.constant dense<0xFF800000> : vector<16xf32>
      %126 = vector.multi_reduction <maximumf>, %124, %cst_71 [1] : vector<16x8xf32> to vector<16xf32>
      %127 = vector.shape_cast %126 : vector<16xf32> to vector<16x1xf32>
      %128 = arith.maximumf %125, %127 : vector<16x1xf32>
      %129 = arith.subf %125, %128 : vector<16x1xf32>
      %130 = math.exp %129 : vector<16x1xf32>
      %131 = vector.broadcast %128 : vector<16x1xf32> to vector<16x8xf32>
      %132 = arith.subf %124, %131 : vector<16x8xf32>
      %133 = math.exp %132 : vector<16x8xf32>
      %c0_72 = arith.constant 0 : index
      %c0_73 = arith.constant 0 : index
      %134 = vector.load %arg15[%c0_72, %c0_73] : memref<16x1xf32, #tpu.memory_space<vmem>>, vector<16x1xf32>
      %135 = arith.mulf %130, %134 : vector<16x1xf32>
      %cst_74 = arith.constant dense<0.000000e+00> : vector<16xf32>
      %136 = vector.multi_reduction <add>, %133, %cst_74 [1] : vector<16x8xf32> to vector<16xf32>
      %137 = vector.shape_cast %136 : vector<16xf32> to vector<16x1xf32>
      %138 = arith.addf %135, %137 : vector<16x1xf32>
      %c0_75 = arith.constant 0 : index
      %c0_76 = arith.constant 0 : index
      %139 = vector.load %arg15[%c0_75, %c0_76] : memref<16x1xf32, #tpu.memory_space<vmem>>, vector<16x1xf32>
      tpu.vector_store %arg15[%c0_75, %c0_76], %138 {strides = array<i32>} : memref<16x1xf32, #tpu.memory_space<vmem>>, vector<16x1xf32>,
      %c0_77 = arith.constant 0 : index
      %c0_78 = arith.constant 0 : index
      %140 = vector.load %arg16[%c0_77, %c0_78] : memref<16x8xf32, #tpu.memory_space<vmem>>, vector<16x8xf32>
      %141 = vector.broadcast %130 : vector<16x1xf32> to vector<16x8xf32>
      %142 = arith.mulf %141, %140 : vector<16x8xf32>
      %143 = arith.truncf %133 : vector<16x8xf32> to vector<16x8xbf16>
      %cst_79 = arith.constant dense<0.000000e+00> : vector<16x8xf32>
      %144 = tpu.matmul %143, %116, %cst_79 {dimension_numbers = #tpu.dot_dimension_numbers<[1], [0], [0], [1], [0, 0, 1, 1], [], []>} : vector<16x8xbf16>, vector<8x8xbf16>, vector<16x8xf32> -> vector<16x8xf32>
      %145 = arith.addf %142, %144 : vector<16x8xf32>
      %c0_80 = arith.constant 0 : index
      %c0_81 = arith.constant 0 : index
      %146 = vector.load %arg16[%c0_80, %c0_81] : memref<16x8xf32, #tpu.memory_space<vmem>>, vector<16x8xf32>
      tpu.vector_store %arg16[%c0_80, %c0_81], %145 {strides = array<i32>} : memref<16x8xf32, #tpu.memory_space<vmem>>, vector<16x8xf32>,
      %c0_82 = arith.constant 0 : index
      %c0_83 = arith.constant 0 : index
      %147 = vector.load %arg14[%c0_82, %c0_83] : memref<16x1xf32, #tpu.memory_space<vmem>>, vector<16x1xf32>
      tpu.vector_store %arg14[%c0_82, %c0_83], %128 {strides = array<i32>} : memref<16x1xf32, #tpu.memory_space<vmem>>, vector<16x1xf32>,
    } else {
    }
    %c7_i32_20 = arith.constant 7 : i32
    %48 = arith.addi %1, %c7_i32_20 : i32
    %c8_i32_21 = arith.constant 8 : i32
    %49 = arith.cmpi sge, %48, %c8_i32_21 : i32
    %50 = arith.extui %49 : i1 to i32
    %c0_i32_22 = arith.constant 0 : i32
    %51 = arith.cmpi ne, %50, %c0_i32_22 : i32
    scf.if %51 {
      %c8_61 = arith.constant 8 : index
      %c0_62 = arith.constant 0 : index
      %115 = vector.load %arg11[%c8_61, %c0_62] : memref<16x16xbf16, #tpu.memory_space<vmem>>, vector<8x8xbf16>
      %c8_63 = arith.constant 8 : index
      %c0_64 = arith.constant 0 : index
      %116 = vector.load %arg12[%c8_63, %c0_64] : memref<16x16xbf16, #tpu.memory_space<vmem>>, vector<8x8xbf16>
      %cst_65 = arith.constant dense<0.000000e+00> : vector<16x8xf32>
      %117 = tpu.matmul %37, %115, %cst_65 {dimension_numbers = #tpu.dot_dimension_numbers<[1], [1], [0], [0], [0, 0, 1, 0], [], []>} : vector<16x8xbf16>, vector<8x8xbf16>, vector<16x8xf32> -> vector<16x8xf32>
      %c8_i32_66 = arith.constant 8 : i32
      %118 = arith.subi %1, %c8_i32_66 : i32
      %119 = vector.broadcast %118 : i32 to vector<16x8xi32>
      %120 = arith.cmpi sgt, %16, %119 : vector<16x8xi32>
      %cst_67 = arith.constant -1.000000e+30 : f32
      %cst_68 = arith.constant 0.000000e+00 : f32
      %121 = vector.broadcast %cst_67 : f32 to vector<16x8xf32>
      %122 = vector.broadcast %cst_68 : f32 to vector<16x8xf32>
      %123 = arith.select %120, %121, %122 : vector<16x8xi1>, vector<16x8xf32>
      %124 = arith.addf %117, %123 : vector<16x8xf32>
      %c0_69 = arith.constant 0 : index
      %c0_70 = arith.constant 0 : index
      %125 = vector.load %arg14[%c0_69, %c0_70] : memref<16x1xf32, #tpu.memory_space<vmem>>, vector<16x1xf32>
      %cst_71 = arith.constant dense<0xFF800000> : vector<16xf32>
      %126 = vector.multi_reduction <maximumf>, %124, %cst_71 [1] : vector<16x8xf32> to vector<16xf32>
      %127 = vector.shape_cast %126 : vector<16xf32> to vector<16x1xf32>
      %128 = arith.maximumf %125, %127 : vector<16x1xf32>
      %129 = arith.subf %125, %128 : vector<16x1xf32>
      %130 = math.exp %129 : vector<16x1xf32>
      %131 = vector.broadcast %128 : vector<16x1xf32> to vector<16x8xf32>
      %132 = arith.subf %124, %131 : vector<16x8xf32>
      %133 = math.exp %132 : vector<16x8xf32>
      %c0_72 = arith.constant 0 : index
      %c0_73 = arith.constant 0 : index
      %134 = vector.load %arg15[%c0_72, %c0_73] : memref<16x1xf32, #tpu.memory_space<vmem>>, vector<16x1xf32>
      %135 = arith.mulf %130, %134 : vector<16x1xf32>
      %cst_74 = arith.constant dense<0.000000e+00> : vector<16xf32>
      %136 = vector.multi_reduction <add>, %133, %cst_74 [1] : vector<16x8xf32> to vector<16xf32>
      %137 = vector.shape_cast %136 : vector<16xf32> to vector<16x1xf32>
      %138 = arith.addf %135, %137 : vector<16x1xf32>
      %c0_75 = arith.constant 0 : index
      %c0_76 = arith.constant 0 : index
      %139 = vector.load %arg15[%c0_75, %c0_76] : memref<16x1xf32, #tpu.memory_space<vmem>>, vector<16x1xf32>
      tpu.vector_store %arg15[%c0_75, %c0_76], %138 {strides = array<i32>} : memref<16x1xf32, #tpu.memory_space<vmem>>, vector<16x1xf32>,
      %c0_77 = arith.constant 0 : index
      %c0_78 = arith.constant 0 : index
      %140 = vector.load %arg16[%c0_77, %c0_78] : memref<16x8xf32, #tpu.memory_space<vmem>>, vector<16x8xf32>
      %141 = vector.broadcast %130 : vector<16x1xf32> to vector<16x8xf32>
      %142 = arith.mulf %141, %140 : vector<16x8xf32>
      %143 = arith.truncf %133 : vector<16x8xf32> to vector<16x8xbf16>
      %cst_79 = arith.constant dense<0.000000e+00> : vector<16x8xf32>
      %144 = tpu.matmul %143, %116, %cst_79 {dimension_numbers = #tpu.dot_dimension_numbers<[1], [0], [0], [1], [0, 0, 1, 1], [], []>} : vector<16x8xbf16>, vector<8x8xbf16>, vector<16x8xf32> -> vector<16x8xf32>
      %145 = arith.addf %142, %144 : vector<16x8xf32>
      %c0_80 = arith.constant 0 : index
      %c0_81 = arith.constant 0 : index
      %146 = vector.load %arg16[%c0_80, %c0_81] : memref<16x8xf32, #tpu.memory_space<vmem>>, vector<16x8xf32>
      tpu.vector_store %arg16[%c0_80, %c0_81], %145 {strides = array<i32>} : memref<16x8xf32, #tpu.memory_space<vmem>>, vector<16x8xf32>,
      %c0_82 = arith.constant 0 : index
      %c0_83 = arith.constant 0 : index
      %147 = vector.load %arg14[%c0_82, %c0_83] : memref<16x1xf32, #tpu.memory_space<vmem>>, vector<16x1xf32>
      tpu.vector_store %arg14[%c0_82, %c0_83], %128 {strides = array<i32>} : memref<16x1xf32, #tpu.memory_space<vmem>>, vector<16x1xf32>,
    } else {
    }
    %c0_23 = arith.constant 0 : index
    %c0_24 = arith.constant 0 : index
    %52 = vector.load %arg16[%c0_23, %c0_24] : memref<16x8xf32, #tpu.memory_space<vmem>>, vector<16x8xf32>
    %c0_25 = arith.constant 0 : index
    %c0_26 = arith.constant 0 : index
    %53 = vector.load %arg15[%c0_25, %c0_26] : memref<16x1xf32, #tpu.memory_space<vmem>>, vector<16x1xf32>
    %54 = tpu.reciprocal %53 {approx = true} : vector<16x1xf32> -> vector<16x1xf32>
    %55 = vector.broadcast %54 : vector<16x1xf32> to vector<16x8xf32>
    %56 = arith.mulf %52, %55 : vector<16x8xf32>
    %57 = vector.extract_strided_slice %56 {offsets = [0, 0], sizes = [8, 8], strides = [1, 1]} : vector<16x8xf32> to vector<8x8xf32>
    %58 = arith.truncf %57 : vector<8x8xf32> to vector<8x8xbf16>
    %c0_27 = arith.constant 0 : index
    %c0_28 = arith.constant 0 : index
    %59 = vector.load %arg13[%c0_27, %c0_28] : memref<8x32xbf16, #tpu.memory_space<vmem>>, vector<8x8xbf16>
    tpu.vector_store %arg13[%c0_27, %c0_28], %58 {strides = array<i32>} : memref<8x32xbf16, #tpu.memory_space<vmem>>, vector<8x8xbf16>,
    %60 = vector.extract_strided_slice %56 {offsets = [8, 0], sizes = [8, 8], strides = [1, 1]} : vector<16x8xf32> to vector<8x8xf32>
    %61 = arith.truncf %60 : vector<8x8xf32> to vector<8x8xbf16>
    %c0_29 = arith.constant 0 : index
    %c8 = arith.constant 8 : index
    %62 = vector.load %arg13[%c0_29, %c8] : memref<8x32xbf16, #tpu.memory_space<vmem>>, vector<8x8xbf16>
    tpu.vector_store %arg13[%c0_29, %c8], %61 {strides = array<i32>} : memref<8x32xbf16, #tpu.memory_space<vmem>>, vector<8x8xbf16>,
    %63 = vector.extract_strided_slice %8 {offsets = [0, 16], sizes = [8, 8], strides = [1, 1]} : vector<8x32xf32> to vector<8x8xf32>
    %64 = arith.mulf %63, %10 : vector<8x8xf32>
    %65 = vector.extract_strided_slice %63 {offsets = [0, 4], sizes = [8, 4], strides = [1, 1]} : vector<8x8xf32> to vector<8x4xf32>
    %66 = vector.extract_strided_slice %63 {offsets = [0, 0], sizes = [8, 4], strides = [1, 1]} : vector<8x8xf32> to vector<8x4xf32>
    %67 = tpu.concatenate %65, %66 in 1 : vector<8x4xf32>, vector<8x4xf32> -> vector<8x8xf32>
    %68 = arith.mulf %67, %12 : vector<8x8xf32>
    %69 = arith.addf %64, %68 : vector<8x8xf32>
    %cst_30 = arith.constant 0.353553385 : f32
    %70 = vector.broadcast %cst_30 : f32 to vector<8x8xf32>
    %71 = arith.mulf %69, %70 : vector<8x8xf32>
    %72 = arith.truncf %71 : vector<8x8xf32> to vector<8x8xbf16>
    %73 = vector.extract_strided_slice %8 {offsets = [0, 24], sizes = [8, 8], strides = [1, 1]} : vector<8x32xf32> to vector<8x8xf32>
    %74 = arith.mulf %73, %10 : vector<8x8xf32>
    %75 = vector.extract_strided_slice %73 {offsets = [0, 4], sizes = [8, 4], strides = [1, 1]} : vector<8x8xf32> to vector<8x4xf32>
    %76 = vector.extract_strided_slice %73 {offsets = [0, 0], sizes = [8, 4], strides = [1, 1]} : vector<8x8xf32> to vector<8x4xf32>
    %77 = tpu.concatenate %75, %76 in 1 : vector<8x4xf32>, vector<8x4xf32> -> vector<8x8xf32>
    %78 = arith.mulf %77, %12 : vector<8x8xf32>
    %79 = arith.addf %74, %78 : vector<8x8xf32>
    %cst_31 = arith.constant 0.353553385 : f32
    %80 = vector.broadcast %cst_31 : f32 to vector<8x8xf32>
    %81 = arith.mulf %79, %80 : vector<8x8xf32>
    %82 = arith.truncf %81 : vector<8x8xf32> to vector<8x8xbf16>
    %83 = tpu.concatenate %72, %82 in 0 : vector<8x8xbf16>, vector<8x8xbf16> -> vector<16x8xbf16>
    %cst_32 = arith.constant -1.000000e+30 : f32
    %84 = vector.broadcast %cst_32 : f32 to vector<16x1xf32>
    %c0_33 = arith.constant 0 : index
    %c0_34 = arith.constant 0 : index
    %85 = vector.load %arg14[%c0_33, %c0_34] : memref<16x1xf32, #tpu.memory_space<vmem>>, vector<16x1xf32>
    tpu.vector_store %arg14[%c0_33, %c0_34], %84 {strides = array<i32>} : memref<16x1xf32, #tpu.memory_space<vmem>>, vector<16x1xf32>,
    %cst_35 = arith.constant 0.000000e+00 : f32
    %86 = vector.broadcast %cst_35 : f32 to vector<16x1xf32>
    %c0_36 = arith.constant 0 : index
    %c0_37 = arith.constant 0 : index
    %87 = vector.load %arg15[%c0_36, %c0_37] : memref<16x1xf32, #tpu.memory_space<vmem>>, vector<16x1xf32>
    tpu.vector_store %arg15[%c0_36, %c0_37], %86 {strides = array<i32>} : memref<16x1xf32, #tpu.memory_space<vmem>>, vector<16x1xf32>,
    %cst_38 = arith.constant 0.000000e+00 : f32
    %88 = vector.broadcast %cst_38 : f32 to vector<16x8xf32>
    %c0_39 = arith.constant 0 : index
    %c0_40 = arith.constant 0 : index
    %89 = vector.load %arg16[%c0_39, %c0_40] : memref<16x8xf32, #tpu.memory_space<vmem>>, vector<16x8xf32>
    tpu.vector_store %arg16[%c0_39, %c0_40], %88 {strides = array<i32>} : memref<16x8xf32, #tpu.memory_space<vmem>>, vector<16x8xf32>,
    %c7_i32_41 = arith.constant 7 : i32
    %90 = arith.addi %1, %c7_i32_41 : i32
    %c0_i32_42 = arith.constant 0 : i32
    %91 = arith.cmpi sge, %90, %c0_i32_42 : i32
    %92 = arith.extui %91 : i1 to i32
    %c0_i32_43 = arith.constant 0 : i32
    %93 = arith.cmpi ne, %92, %c0_i32_43 : i32
    scf.if %93 {
      %c0_61 = arith.constant 0 : index
      %c8_62 = arith.constant 8 : index
      %115 = vector.load %arg11[%c0_61, %c8_62] : memref<16x16xbf16, #tpu.memory_space<vmem>>, vector<8x8xbf16>
      %c0_63 = arith.constant 0 : index
      %c8_64 = arith.constant 8 : index
      %116 = vector.load %arg12[%c0_63, %c8_64] : memref<16x16xbf16, #tpu.memory_space<vmem>>, vector<8x8xbf16>
      %cst_65 = arith.constant dense<0.000000e+00> : vector<16x8xf32>
      %117 = tpu.matmul %83, %115, %cst_65 {dimension_numbers = #tpu.dot_dimension_numbers<[1], [1], [0], [0], [0, 0, 1, 0], [], []>} : vector<16x8xbf16>, vector<8x8xbf16>, vector<16x8xf32> -> vector<16x8xf32>
      %c0_i32_66 = arith.constant 0 : i32
      %118 = arith.subi %1, %c0_i32_66 : i32
      %119 = vector.broadcast %118 : i32 to vector<16x8xi32>
      %120 = arith.cmpi sgt, %16, %119 : vector<16x8xi32>
      %cst_67 = arith.constant -1.000000e+30 : f32
      %cst_68 = arith.constant 0.000000e+00 : f32
      %121 = vector.broadcast %cst_67 : f32 to vector<16x8xf32>
      %122 = vector.broadcast %cst_68 : f32 to vector<16x8xf32>
      %123 = arith.select %120, %121, %122 : vector<16x8xi1>, vector<16x8xf32>
      %124 = arith.addf %117, %123 : vector<16x8xf32>
      %c0_69 = arith.constant 0 : index
      %c0_70 = arith.constant 0 : index
      %125 = vector.load %arg14[%c0_69, %c0_70] : memref<16x1xf32, #tpu.memory_space<vmem>>, vector<16x1xf32>
      %cst_71 = arith.constant dense<0xFF800000> : vector<16xf32>
      %126 = vector.multi_reduction <maximumf>, %124, %cst_71 [1] : vector<16x8xf32> to vector<16xf32>
      %127 = vector.shape_cast %126 : vector<16xf32> to vector<16x1xf32>
      %128 = arith.maximumf %125, %127 : vector<16x1xf32>
      %129 = arith.subf %125, %128 : vector<16x1xf32>
      %130 = math.exp %129 : vector<16x1xf32>
      %131 = vector.broadcast %128 : vector<16x1xf32> to vector<16x8xf32>
      %132 = arith.subf %124, %131 : vector<16x8xf32>
      %133 = math.exp %132 : vector<16x8xf32>
      %c0_72 = arith.constant 0 : index
      %c0_73 = arith.constant 0 : index
      %134 = vector.load %arg15[%c0_72, %c0_73] : memref<16x1xf32, #tpu.memory_space<vmem>>, vector<16x1xf32>
      %135 = arith.mulf %130, %134 : vector<16x1xf32>
      %cst_74 = arith.constant dense<0.000000e+00> : vector<16xf32>
      %136 = vector.multi_reduction <add>, %133, %cst_74 [1] : vector<16x8xf32> to vector<16xf32>
      %137 = vector.shape_cast %136 : vector<16xf32> to vector<16x1xf32>
      %138 = arith.addf %135, %137 : vector<16x1xf32>
      %c0_75 = arith.constant 0 : index
      %c0_76 = arith.constant 0 : index
      %139 = vector.load %arg15[%c0_75, %c0_76] : memref<16x1xf32, #tpu.memory_space<vmem>>, vector<16x1xf32>
      tpu.vector_store %arg15[%c0_75, %c0_76], %138 {strides = array<i32>} : memref<16x1xf32, #tpu.memory_space<vmem>>, vector<16x1xf32>,
      %c0_77 = arith.constant 0 : index
      %c0_78 = arith.constant 0 : index
      %140 = vector.load %arg16[%c0_77, %c0_78] : memref<16x8xf32, #tpu.memory_space<vmem>>, vector<16x8xf32>
      %141 = vector.broadcast %130 : vector<16x1xf32> to vector<16x8xf32>
      %142 = arith.mulf %141, %140 : vector<16x8xf32>
      %143 = arith.truncf %133 : vector<16x8xf32> to vector<16x8xbf16>
      %cst_79 = arith.constant dense<0.000000e+00> : vector<16x8xf32>
      %144 = tpu.matmul %143, %116, %cst_79 {dimension_numbers = #tpu.dot_dimension_numbers<[1], [0], [0], [1], [0, 0, 1, 1], [], []>} : vector<16x8xbf16>, vector<8x8xbf16>, vector<16x8xf32> -> vector<16x8xf32>
      %145 = arith.addf %142, %144 : vector<16x8xf32>
      %c0_80 = arith.constant 0 : index
      %c0_81 = arith.constant 0 : index
      %146 = vector.load %arg16[%c0_80, %c0_81] : memref<16x8xf32, #tpu.memory_space<vmem>>, vector<16x8xf32>
      tpu.vector_store %arg16[%c0_80, %c0_81], %145 {strides = array<i32>} : memref<16x8xf32, #tpu.memory_space<vmem>>, vector<16x8xf32>,
      %c0_82 = arith.constant 0 : index
      %c0_83 = arith.constant 0 : index
      %147 = vector.load %arg14[%c0_82, %c0_83] : memref<16x1xf32, #tpu.memory_space<vmem>>, vector<16x1xf32>
      tpu.vector_store %arg14[%c0_82, %c0_83], %128 {strides = array<i32>} : memref<16x1xf32, #tpu.memory_space<vmem>>, vector<16x1xf32>,
    } else {
    }
    %c7_i32_44 = arith.constant 7 : i32
    %94 = arith.addi %1, %c7_i32_44 : i32
    %c8_i32_45 = arith.constant 8 : i32
    %95 = arith.cmpi sge, %94, %c8_i32_45 : i32
    %96 = arith.extui %95 : i1 to i32
    %c0_i32_46 = arith.constant 0 : i32
    %97 = arith.cmpi ne, %96, %c0_i32_46 : i32
    scf.if %97 {
      %c8_61 = arith.constant 8 : index
      %c8_62 = arith.constant 8 : index
      %115 = vector.load %arg11[%c8_61, %c8_62] : memref<16x16xbf16, #tpu.memory_space<vmem>>, vector<8x8xbf16>
      %c8_63 = arith.constant 8 : index
      %c8_64 = arith.constant 8 : index
      %116 = vector.load %arg12[%c8_63, %c8_64] : memref<16x16xbf16, #tpu.memory_space<vmem>>, vector<8x8xbf16>
      %cst_65 = arith.constant dense<0.000000e+00> : vector<16x8xf32>
      %117 = tpu.matmul %83, %115, %cst_65 {dimension_numbers = #tpu.dot_dimension_numbers<[1], [1], [0], [0], [0, 0, 1, 0], [], []>} : vector<16x8xbf16>, vector<8x8xbf16>, vector<16x8xf32> -> vector<16x8xf32>
      %c8_i32_66 = arith.constant 8 : i32
      %118 = arith.subi %1, %c8_i32_66 : i32
      %119 = vector.broadcast %118 : i32 to vector<16x8xi32>
      %120 = arith.cmpi sgt, %16, %119 : vector<16x8xi32>
      %cst_67 = arith.constant -1.000000e+30 : f32
      %cst_68 = arith.constant 0.000000e+00 : f32
      %121 = vector.broadcast %cst_67 : f32 to vector<16x8xf32>
      %122 = vector.broadcast %cst_68 : f32 to vector<16x8xf32>
      %123 = arith.select %120, %121, %122 : vector<16x8xi1>, vector<16x8xf32>
      %124 = arith.addf %117, %123 : vector<16x8xf32>
      %c0_69 = arith.constant 0 : index
      %c0_70 = arith.constant 0 : index
      %125 = vector.load %arg14[%c0_69, %c0_70] : memref<16x1xf32, #tpu.memory_space<vmem>>, vector<16x1xf32>
      %cst_71 = arith.constant dense<0xFF800000> : vector<16xf32>
      %126 = vector.multi_reduction <maximumf>, %124, %cst_71 [1] : vector<16x8xf32> to vector<16xf32>
      %127 = vector.shape_cast %126 : vector<16xf32> to vector<16x1xf32>
      %128 = arith.maximumf %125, %127 : vector<16x1xf32>
      %129 = arith.subf %125, %128 : vector<16x1xf32>
      %130 = math.exp %129 : vector<16x1xf32>
      %131 = vector.broadcast %128 : vector<16x1xf32> to vector<16x8xf32>
      %132 = arith.subf %124, %131 : vector<16x8xf32>
      %133 = math.exp %132 : vector<16x8xf32>
      %c0_72 = arith.constant 0 : index
      %c0_73 = arith.constant 0 : index
      %134 = vector.load %arg15[%c0_72, %c0_73] : memref<16x1xf32, #tpu.memory_space<vmem>>, vector<16x1xf32>
      %135 = arith.mulf %130, %134 : vector<16x1xf32>
      %cst_74 = arith.constant dense<0.000000e+00> : vector<16xf32>
      %136 = vector.multi_reduction <add>, %133, %cst_74 [1] : vector<16x8xf32> to vector<16xf32>
      %137 = vector.shape_cast %136 : vector<16xf32> to vector<16x1xf32>
      %138 = arith.addf %135, %137 : vector<16x1xf32>
      %c0_75 = arith.constant 0 : index
      %c0_76 = arith.constant 0 : index
      %139 = vector.load %arg15[%c0_75, %c0_76] : memref<16x1xf32, #tpu.memory_space<vmem>>, vector<16x1xf32>
      tpu.vector_store %arg15[%c0_75, %c0_76], %138 {strides = array<i32>} : memref<16x1xf32, #tpu.memory_space<vmem>>, vector<16x1xf32>,
      %c0_77 = arith.constant 0 : index
      %c0_78 = arith.constant 0 : index
      %140 = vector.load %arg16[%c0_77, %c0_78] : memref<16x8xf32, #tpu.memory_space<vmem>>, vector<16x8xf32>
      %141 = vector.broadcast %130 : vector<16x1xf32> to vector<16x8xf32>
      %142 = arith.mulf %141, %140 : vector<16x8xf32>
      %143 = arith.truncf %133 : vector<16x8xf32> to vector<16x8xbf16>
      %cst_79 = arith.constant dense<0.000000e+00> : vector<16x8xf32>
      %144 = tpu.matmul %143, %116, %cst_79 {dimension_numbers = #tpu.dot_dimension_numbers<[1], [0], [0], [1], [0, 0, 1, 1], [], []>} : vector<16x8xbf16>, vector<8x8xbf16>, vector<16x8xf32> -> vector<16x8xf32>
      %145 = arith.addf %142, %144 : vector<16x8xf32>
      %c0_80 = arith.constant 0 : index
      %c0_81 = arith.constant 0 : index
      %146 = vector.load %arg16[%c0_80, %c0_81] : memref<16x8xf32, #tpu.memory_space<vmem>>, vector<16x8xf32>
      tpu.vector_store %arg16[%c0_80, %c0_81], %145 {strides = array<i32>} : memref<16x8xf32, #tpu.memory_space<vmem>>, vector<16x8xf32>,
      %c0_82 = arith.constant 0 : index
      %c0_83 = arith.constant 0 : index
      %147 = vector.load %arg14[%c0_82, %c0_83] : memref<16x1xf32, #tpu.memory_space<vmem>>, vector<16x1xf32>
      tpu.vector_store %arg14[%c0_82, %c0_83], %128 {strides = array<i32>} : memref<16x1xf32, #tpu.memory_space<vmem>>, vector<16x1xf32>,
    } else {
    }
    %c0_47 = arith.constant 0 : index
    %c0_48 = arith.constant 0 : index
    %98 = vector.load %arg16[%c0_47, %c0_48] : memref<16x8xf32, #tpu.memory_space<vmem>>, vector<16x8xf32>
    %c0_49 = arith.constant 0 : index
    %c0_50 = arith.constant 0 : index
    %99 = vector.load %arg15[%c0_49, %c0_50] : memref<16x1xf32, #tpu.memory_space<vmem>>, vector<16x1xf32>
    %100 = tpu.reciprocal %99 {approx = true} : vector<16x1xf32> -> vector<16x1xf32>
    %101 = vector.broadcast %100 : vector<16x1xf32> to vector<16x8xf32>
    %102 = arith.mulf %98, %101 : vector<16x8xf32>
    %103 = vector.extract_strided_slice %102 {offsets = [0, 0], sizes = [8, 8], strides = [1, 1]} : vector<16x8xf32> to vector<8x8xf32>
    %104 = arith.truncf %103 : vector<8x8xf32> to vector<8x8xbf16>
    %c0_51 = arith.constant 0 : index
    %c16 = arith.constant 16 : index
    %105 = vector.load %arg13[%c0_51, %c16] : memref<8x32xbf16, #tpu.memory_space<vmem>>, vector<8x8xbf16>
    tpu.vector_store %arg13[%c0_51, %c16], %104 {strides = array<i32>} : memref<8x32xbf16, #tpu.memory_space<vmem>>, vector<8x8xbf16>,
    %106 = vector.extract_strided_slice %102 {offsets = [8, 0], sizes = [8, 8], strides = [1, 1]} : vector<16x8xf32> to vector<8x8xf32>
    %107 = arith.truncf %106 : vector<8x8xf32> to vector<8x8xbf16>
    %c0_52 = arith.constant 0 : index
    %c24 = arith.constant 24 : index
    %108 = vector.load %arg13[%c0_52, %c24] : memref<8x32xbf16, #tpu.memory_space<vmem>>, vector<8x8xbf16>
    tpu.vector_store %arg13[%c0_52, %c24], %107 {strides = array<i32>} : memref<8x32xbf16, #tpu.memory_space<vmem>>, vector<8x8xbf16>,
    %c0_53 = arith.constant 0 : index
    %c0_54 = arith.constant 0 : index
    %109 = vector.load %arg13[%c0_53, %c0_54] : memref<8x32xbf16, #tpu.memory_space<vmem>>, vector<8x32xbf16>
    %c0_55 = arith.constant 0 : index
    %c0_56 = arith.constant 0 : index
    %110 = vector.load %arg7[%c0_55, %c0_56] : memref<32x32xbf16, #tpu.memory_space<vmem>>, vector<32x32xbf16>
    %cst_57 = arith.constant dense<0.000000e+00> : vector<8x32xf32>
    %111 = tpu.matmul %109, %110, %cst_57 {dimension_numbers = #tpu.dot_dimension_numbers<[1], [0], [0], [1], [0, 0, 1, 1], [], []>} : vector<8x32xbf16>, vector<32x32xbf16>, vector<8x32xf32> -> vector<8x32xf32>
    %c0_58 = arith.constant 0 : index
    %c0_59 = arith.constant 0 : index
    %c0_60 = arith.constant 0 : index
    %112 = vector.load %arg10[%c0_58, %c0_59, %c0_60] : memref<1x8x32xf32, #tpu.memory_space<vmem>>, vector<1x8x32xf32>
    %113 = vector.shape_cast %112 : vector<1x8x32xf32> to vector<8x32xf32>
    %114 = vector.shape_cast %111 : vector<8x32xf32> to vector<1x8x32xf32>
    tpu.vector_store %arg10[%c0_58, %c0_59, %c0_60], %114 {strides = array<i32>} : memref<1x8x32xf32, #tpu.memory_space<vmem>>, vector<1x8x32xf32>,
    return
  }
  func.func @transform_0(%arg0: i32, %arg1: i32) -> (i32, i32, i32) {
    %c0_i32 = arith.constant 0 : i32
    %c0_i32_0 = arith.constant 0 : i32
    return %arg0, %arg1, %c0_i32 : i32, i32, i32
  }
  func.func @transform_1(%arg0: i32, %arg1: i32) -> (i32, i32, i32) {
    %c0_i32 = arith.constant 0 : i32
    %c0_i32_0 = arith.constant 0 : i32
    %c0_i32_1 = arith.constant 0 : i32
    return %arg0, %c0_i32, %c0_i32_0 : i32, i32, i32
  }
  func.func @transform_2(%arg0: i32, %arg1: i32) -> (i32, i32) {
    %c0_i32 = arith.constant 0 : i32
    %c0_i32_0 = arith.constant 0 : i32
    %c0_i32_1 = arith.constant 0 : i32
    return %c0_i32, %c0_i32_0 : i32, i32
  }
  func.func @transform_3(%arg0: i32, %arg1: i32) -> (i32, i32) {
    %c0_i32 = arith.constant 0 : i32
    %c0_i32_0 = arith.constant 0 : i32
    %c0_i32_1 = arith.constant 0 : i32
    return %c0_i32, %c0_i32_0 : i32, i32
  }
  func.func @transform_4(%arg0: i32, %arg1: i32) -> (i32, i32) {
    %c0_i32 = arith.constant 0 : i32
    %c0_i32_0 = arith.constant 0 : i32
    %c0_i32_1 = arith.constant 0 : i32
    return %c0_i32, %c0_i32_0 : i32, i32
  }
  func.func @transform_5(%arg0: i32, %arg1: i32) -> (i32, i32) {
    %c0_i32 = arith.constant 0 : i32
    %c0_i32_0 = arith.constant 0 : i32
    %c0_i32_1 = arith.constant 0 : i32
    return %c0_i32, %c0_i32_0 : i32, i32
  }
  func.func @transform_6(%arg0: i32, %arg1: i32) -> (i32, i32) {
    %c0_i32 = arith.constant 0 : i32
    %c0_i32_0 = arith.constant 0 : i32
    %c0_i32_1 = arith.constant 0 : i32
    return %c0_i32, %c0_i32_0 : i32, i32
  }
  func.func @transform_7(%arg0: i32, %arg1: i32) -> (i32, i32) {
    %c0_i32 = arith.constant 0 : i32
    %c0_i32_0 = arith.constant 0 : i32
    %c0_i32_1 = arith.constant 0 : i32
    return %c0_i32, %c0_i32_0 : i32, i32
  }
  func.func @transform_8(%arg0: i32, %arg1: i32) -> (i32, i32, i32) {
    %c0_i32 = arith.constant 0 : i32
    %c0_i32_0 = arith.constant 0 : i32
    return %arg0, %arg1, %c0_i32 : i32, i32, i32
  }
}

</mosaic_0001>

<llo_original>
// kernel: grouped_query_attention.1
$region0: #{grouped_query_attention.1}
  #allocation0 [shape = 'u32[]', space=smem, size = 0x4, offset = 0x4, fixed_abs, tag = 'smem constant byte address 0x4 - core index']
  #allocation1 [shape = 'u32[72,128]{1,0:T(1,128)}', space=vmem, size = 0x9000, scoped, tag = 'internal scratch']
  #allocation2 [shape = 'bf16[16,16]{1,0:T(8,128)(2,1)}', space=vmem, size = 0x1000, scoped, tag = 'scratch operand']
  #allocation3 [shape = 'bf16[16,16]{1,0:T(8,128)(2,1)}', space=vmem, size = 0x1000, scoped, tag = 'scratch operand']
  #allocation4 [shape = 'bf16[8,32]{1,0:T(8,128)(2,1)}', space=vmem, size = 0x800, scoped, tag = 'scratch operand']
  #allocation5 [shape = 'f32[16,1]{1,0:T(8,128)}', space=vmem, size = 0x2000, scoped, tag = 'scratch operand']
  #allocation6 [shape = 'f32[16,1]{1,0:T(8,128)}', space=vmem, size = 0x2000, scoped, tag = 'scratch operand']
  #allocation7 [shape = 'f32[16,8]{1,0:T(8,128)}', space=vmem, size = 0x2000, scoped, tag = 'scratch operand']
  %s0 = inlined_call_operand.vmem [shape: bf16[2,16,32], index: 0, kind: input, shape index: {}, may-alias: {0,1}]
  %s1 = inlined_call_operand.vmem [shape: bf16[2,16,32], index: 1, kind: input, shape index: {}, may-alias: {0,1}]
  %s2 = inlined_call_operand.vmem [shape: bf16[32,32], index: 2, kind: input, shape index: {}]
  %s3 = inlined_call_operand.vmem [shape: bf16[32,16], index: 3, kind: input, shape index: {}]
  %s4 = inlined_call_operand.vmem [shape: bf16[32,16], index: 4, kind: input, shape index: {}]
  %s5 = inlined_call_operand.vmem [shape: bf16[32,32], index: 5, kind: input, shape index: {}]
  %s6 = inlined_call_operand.vmem [shape: f32[16,8], index: 6, kind: input, shape index: {}]
  %s7 = inlined_call_operand.vmem [shape: f32[16,8], index: 7, kind: input, shape index: {}]
  %s8 = inlined_call_operand.hbm [shape: f32[2,16,32], index: 8, kind: output, shape index: {}]
  %s9 = sld [smem:[#allocation0]]
  $region85: #{grouped_query_attention.1} parent=0
    _
  %s11 = ssub.s32 1, %s9
  %s12 = scalar_select 0, %s11, %s9
  $region1: #{grouped_query_attention.1} parent=0
    #allocation8 [shape = 'u8[8192]{0}', space=vmem, size = 0x2000, scoped, tag = 'output window, operand 0']
    #allocation9 [shape = 's32[2]{0}', space=sflag, size = 0x8, scoped, tag = 'scoped memory for grouped_query_attention.1']
    %13 = vsyncpa [#allocation9], 0
    %s14 = scalar_lea.sflag [#allocation9], 1
    %15 = vsyncpa %s14, 0
    loop: start=0, step=1, limit=6
    $region2: #{grouped_query_attention.1} parent=1 // loop_pre_header
      _
    $region3: #{grouped_query_attention.1} parent=1 // loop_header
      %s17 = sphi 0, %s21
      %p18 = scmp.ge.s32.totalorder %s17, 6
      %s24 = sphi 0, %s36
      %s25 = sphi 0, %s32
      %s26 = sphi 0, %s24
      %s27 = sphi 0, %s25
      %s28 = sphi 0, %s26
      %s29 = sphi 0, %s27
      %s41 = sphi 0, %s43
      %s44 = sphi 0, %s41
      %s45 = sphi 0, %s44
      %s61 = sphi 0, %s45
      %s67 = sphi 0, %s69
      %s70 = sphi 0, %s67
      %s71 = sphi 0, %s70
      %s87 = sphi 0, %s71
      %s91 = sphi 0, %s91
      %s93 = sphi 0, %s91
      %s94 = sphi 0, %s93
      %s108 = sphi 0, %s94
      %s112 = sphi 0, %s112
      %s114 = sphi 0, %s112
      %s115 = sphi 0, %s114
      %s129 = sphi 0, %s115
      %s133 = sphi 0, %s133
      %s135 = sphi 0, %s133
      %s136 = sphi 0, %s135
      %s150 = sphi 0, %s136
      %s154 = sphi 0, %s154
      %s156 = sphi 0, %s154
      %s157 = sphi 0, %s156
      %s171 = sphi 0, %s157
      %s175 = sphi 0, %s175
      %s177 = sphi 0, %s175
      %s178 = sphi 0, %s177
      %s192 = sphi 0, %s178
      %s196 = sphi 0, %s196
      %s198 = sphi 0, %s196
      %s199 = sphi 0, %s198
      %s213 = sphi 0, %s199
      %s221 = sphi 0, %s223
      %s224 = sphi 0, %s221
      %s225 = sphi 0, %s224
      %s241 = sphi 0, %s225
    $region4: #{grouped_query_attention.1} parent=1 // loop_header_branch
      %20 = sbr.rel (%p18) target = $region8
    $region5: #{grouped_query_attention.1} parent=1 // loop_body
      %s22 = ssub.s32 %s17, 1
      %s23 = ssub.s32 %s17, 2
      %s30 = sadd.s32 1, %s25
      %p31 = scmp.ge.s32.totalorder %s30, 2
      %s32 = scalar_select %p31, 0, %s30
      %s33 = sadd.s32 1, %s24
      %s34 = scalar_select %p31, %s33, %s24
      %p35 = scmp.ge.s32.totalorder %s34, 2
      %s36 = scalar_select %p35, 0, %s34
      %s37 = ssub.s32 %s24, %s36
      %s38 = ssub.s32 %s25, %s32
      %s39 = sor.u32 %s37, %s38
      %p40 = scmp.eq.s32.totalorder %s39, 0
      %s42 = sadd.s32 %s41, 1
      %s43 = scalar_select %p40, %s41, %s42
      %p46 = pneg %p40
      %p47 = scmp.eq.s32.totalorder %s17, 3
      %p48 = por %p46, %p47
      %p49 = scmp.ne.s32.totalorder %s41, %s44
      %p50 = scmp.eq.s32.totalorder %s17, 0
      %p51 = por %p49, %p50
      %p52 = scmp.ne.s32.totalorder %s41, %s44
      %p53 = scmp.eq.s32.totalorder %s22, 3
      %p54 = por %p52, %p53
      %p55 = scmp.ne.s32.totalorder %s44, %s45
      %p56 = scmp.eq.s32.totalorder %s22, 0
      %p57 = por %p55, %p56
      %p58 = scmp.ne.s32.totalorder %s44, %s45
      %p59 = scmp.eq.s32.totalorder %s23, 3
      %p60 = por %p58, %p59
      %p62 = scmp.ne.s32.totalorder %s45, %s61
      %p63 = scmp.eq.s32.totalorder %s23, 0
      %p64 = por %p62, %p63
      %s65 = ssub.s32 %s24, %s36
      %p66 = scmp.eq.s32.totalorder %s65, 0
      %s68 = sadd.s32 %s67, 1
      %s69 = scalar_select %p66, %s67, %s68
      %p72 = pneg %p66
      %p73 = scmp.eq.s32.totalorder %s17, 3
      %p74 = por %p72, %p73
      %p75 = scmp.ne.s32.totalorder %s67, %s70
      %p76 = scmp.eq.s32.totalorder %s17, 0
      %p77 = por %p75, %p76
      %p78 = scmp.ne.s32.totalorder %s67, %s70
      %p79 = scmp.eq.s32.totalorder %s22, 3
      %p80 = por %p78, %p79
      %p81 = scmp.ne.s32.totalorder %s70, %s71
      %p82 = scmp.eq.s32.totalorder %s22, 0
      %p83 = por %p81, %p82
      %p84 = scmp.ne.s32.totalorder %s70, %s71
      %p85 = scmp.eq.s32.totalorder %s23, 3
      %p86 = por %p84, %p85
      %p88 = scmp.ne.s32.totalorder %s71, %s87
      %p89 = scmp.eq.s32.totalorder %s23, 0
      %p90 = por %p88, %p89
      %s92 = sadd.s32 %s91, 1
      %p95 = scmp.eq.s32.totalorder %s17, 3
      %p96 = scmp.ne.s32.totalorder %s91, %s93
      %p97 = scmp.eq.s32.totalorder %s17, 0
      %p98 = por %p96, %p97
      %p99 = scmp.ne.s32.totalorder %s91, %s93
      %p100 = scmp.eq.s32.totalorder %s22, 3
      %p101 = por %p99, %p100
      %p102 = scmp.ne.s32.totalorder %s93, %s94
      %p103 = scmp.eq.s32.totalorder %s22, 0
      %p104 = por %p102, %p103
      %p105 = scmp.ne.s32.totalorder %s93, %s94
      %p106 = scmp.eq.s32.totalorder %s23, 3
      %p107 = por %p105, %p106
      %p109 = scmp.ne.s32.totalorder %s94, %s108
      %p110 = scmp.eq.s32.totalorder %s23, 0
      %p111 = por %p109, %p110
      %s113 = sadd.s32 %s112, 1
      %p116 = scmp.eq.s32.totalorder %s17, 3
      %p117 = scmp.ne.s32.totalorder %s112, %s114
      %p118 = scmp.eq.s32.totalorder %s17, 0
      %p119 = por %p117, %p118
      %p120 = scmp.ne.s32.totalorder %s112, %s114
      %p121 = scmp.eq.s32.totalorder %s22, 3
      %p122 = por %p120, %p121
      %p123 = scmp.ne.s32.totalorder %s114, %s115
      %p124 = scmp.eq.s32.totalorder %s22, 0
      %p125 = por %p123, %p124
      %p126 = scmp.ne.s32.totalorder %s114, %s115
      %p127 = scmp.eq.s32.totalorder %s23, 3
      %p128 = por %p126, %p127
      %p130 = scmp.ne.s32.totalorder %s115, %s129
      %p131 = scmp.eq.s32.totalorder %s23, 0
      %p132 = por %p130, %p131
      %s134 = sadd.s32 %s133, 1
      %p137 = scmp.eq.s32.totalorder %s17, 3
      %p138 = scmp.ne.s32.totalorder %s133, %s135
      %p139 = scmp.eq.s32.totalorder %s17, 0
      %p140 = por %p138, %p139
      %p141 = scmp.ne.s32.totalorder %s133, %s135
      %p142 = scmp.eq.s32.totalorder %s22, 3
      %p143 = por %p141, %p142
      %p144 = scmp.ne.s32.totalorder %s135, %s136
      %p145 = scmp.eq.s32.totalorder %s22, 0
      %p146 = por %p144, %p145
      %p147 = scmp.ne.s32.totalorder %s135, %s136
      %p148 = scmp.eq.s32.totalorder %s23, 3
      %p149 = por %p147, %p148
      %p151 = scmp.ne.s32.totalorder %s136, %s150
      %p152 = scmp.eq.s32.totalorder %s23, 0
      %p153 = por %p151, %p152
      %s155 = sadd.s32 %s154, 1
      %p158 = scmp.eq.s32.totalorder %s17, 3
      %p159 = scmp.ne.s32.totalorder %s154, %s156
      %p160 = scmp.eq.s32.totalorder %s17, 0
      %p161 = por %p159, %p160
      %p162 = scmp.ne.s32.totalorder %s154, %s156
      %p163 = scmp.eq.s32.totalorder %s22, 3
      %p164 = por %p162, %p163
      %p165 = scmp.ne.s32.totalorder %s156, %s157
      %p166 = scmp.eq.s32.totalorder %s22, 0
      %p167 = por %p165, %p166
      %p168 = scmp.ne.s32.totalorder %s156, %s157
      %p169 = scmp.eq.s32.totalorder %s23, 3
      %p170 = por %p168, %p169
      %p172 = scmp.ne.s32.totalorder %s157, %s171
      %p173 = scmp.eq.s32.totalorder %s23, 0
      %p174 = por %p172, %p173
      %s176 = sadd.s32 %s175, 1
      %p179 = scmp.eq.s32.totalorder %s17, 3
      %p180 = scmp.ne.s32.totalorder %s175, %s177
      %p181 = scmp.eq.s32.totalorder %s17, 0
      %p182 = por %p180, %p181
      %p183 = scmp.ne.s32.totalorder %s175, %s177
      %p184 = scmp.eq.s32.totalorder %s22, 3
      %p185 = por %p183, %p184
      %p186 = scmp.ne.s32.totalorder %s177, %s178
      %p187 = scmp.eq.s32.totalorder %s22, 0
      %p188 = por %p186, %p187
      %p189 = scmp.ne.s32.totalorder %s177, %s178
      %p190 = scmp.eq.s32.totalorder %s23, 3
      %p191 = por %p189, %p190
      %p193 = scmp.ne.s32.totalorder %s178, %s192
      %p194 = scmp.eq.s32.totalorder %s23, 0
      %p195 = por %p193, %p194
      %s197 = sadd.s32 %s196, 1
      %p200 = scmp.eq.s32.totalorder %s17, 3
      %p201 = scmp.ne.s32.totalorder %s196, %s198
      %p202 = scmp.eq.s32.totalorder %s17, 0
      %p203 = por %p201, %p202
      %p204 = scmp.ne.s32.totalorder %s196, %s198
      %p205 = scmp.eq.s32.totalorder %s22, 3
      %p206 = por %p204, %p205
      %p207 = scmp.ne.s32.totalorder %s198, %s199
      %p208 = scmp.eq.s32.totalorder %s22, 0
      %p209 = por %p207, %p208
      %p210 = scmp.ne.s32.totalorder %s198, %s199
      %p211 = scmp.eq.s32.totalorder %s23, 3
      %p212 = por %p210, %p211
      %p214 = scmp.ne.s32.totalorder %s199, %s213
      %p215 = scmp.eq.s32.totalorder %s23, 0
      %p216 = por %p214, %p215
      %s217 = ssub.s32 %s24, %s36
      %s218 = ssub.s32 %s25, %s32
      %s219 = sor.u32 %s217, %s218
      %p220 = scmp.eq.s32.totalorder %s219, 0
      %s222 = sadd.s32 %s221, 1
      %s223 = scalar_select %p220, %s221, %s222
      %p226 = pneg %p220
      %p227 = scmp.eq.s32.totalorder %s17, 3
      %p228 = por %p226, %p227
      %p229 = scmp.ne.s32.totalorder %s221, %s224
      %p230 = scmp.eq.s32.totalorder %s17, 0
      %p231 = por %p229, %p230
      %p232 = scmp.ne.s32.totalorder %s221, %s224
      %p233 = scmp.eq.s32.totalorder %s22, 3
      %p234 = por %p232, %p233
      %p235 = scmp.ne.s32.totalorder %s224, %s225
      %p236 = scmp.eq.s32.totalorder %s22, 0
      %p237 = por %p235, %p236
      %p238 = scmp.ne.s32.totalorder %s224, %s225
      %p239 = scmp.eq.s32.totalorder %s23, 3
      %p240 = por %p238, %p239
      %p242 = scmp.ne.s32.totalorder %s225, %s241
      %p243 = scmp.eq.s32.totalorder %s23, 0
      %p244 = por %p242, %p243
      %p245 = scmp.le.s32.totalorder 1, %s17
      %p246 = scmp.lt.s32.totalorder %s17, 5
      %p247 = pnand %p245, %p246
      %p248 = pneg %p247
      // Predicated region
      $region9: #{grouped_query_attention.1} parent=5 // pred_check
        _
      $region10: #{grouped_query_attention.1} parent=5 // pred_check_branch
        %250 = sbr.rel (%p247) target = $region12
      $region11: #{grouped_query_attention.1} parent=5 // pred_region
        %s251 = ssub.s32 %s17, 1
        // Predicated region
        $region13: #{grouped_query_attention.1} parent=11 // pred_check
          %p252 = pneg %p104
        $region14: #{grouped_query_attention.1} parent=11 // pred_check_branch
          %254 = sbr.rel (%p252) target = $region16
        $region15: #{grouped_query_attention.1} parent=11 // pred_region
          _
        $region16: #{grouped_query_attention.1} parent=11 // pred_fallthru
          _
        // Predicated region
        $region17: #{grouped_query_attention.1} parent=11 // pred_check
          %p255 = pneg %p125
        $region18: #{grouped_query_attention.1} parent=11 // pred_check_branch
          %257 = sbr.rel (%p255) target = $region20
        $region19: #{grouped_query_attention.1} parent=11 // pred_region
          _
        $region20: #{grouped_query_attention.1} parent=11 // pred_fallthru
          _
        // Predicated region
        $region21: #{grouped_query_attention.1} parent=11 // pred_check
          %p258 = pneg %p146
        $region22: #{grouped_query_attention.1} parent=11 // pred_check_branch
          %260 = sbr.rel (%p258) target = $region24
        $region23: #{grouped_query_attention.1} parent=11 // pred_region
          _
        $region24: #{grouped_query_attention.1} parent=11 // pred_fallthru
          _
        // Predicated region
        $region25: #{grouped_query_attention.1} parent=11 // pred_check
          %p261 = pneg %p167
        $region26: #{grouped_query_attention.1} parent=11 // pred_check_branch
          %263 = sbr.rel (%p261) target = $region28
        $region27: #{grouped_query_attention.1} parent=11 // pred_region
          _
        $region28: #{grouped_query_attention.1} parent=11 // pred_fallthru
          _
        // Predicated region
        $region29: #{grouped_query_attention.1} parent=11 // pred_check
          %p264 = pneg %p188
        $region30: #{grouped_query_attention.1} parent=11 // pred_check_branch
          %266 = sbr.rel (%p264) target = $region32
        $region31: #{grouped_query_attention.1} parent=11 // pred_region
          _
        $region32: #{grouped_query_attention.1} parent=11 // pred_fallthru
          _
        // Predicated region
        $region33: #{grouped_query_attention.1} parent=11 // pred_check
          %p267 = pneg %p209
        $region34: #{grouped_query_attention.1} parent=11 // pred_check_branch
          %269 = sbr.rel (%p267) target = $region36
        $region35: #{grouped_query_attention.1} parent=11 // pred_region
          _
        $region36: #{grouped_query_attention.1} parent=11 // pred_fallthru
          _
      $region12: #{grouped_query_attention.1} parent=5 // pred_fallthru
        _
      %p270 = scmp.lt.s32.totalorder %s17, 4
      // Predicated region
      $region37: #{grouped_query_attention.1} parent=5 // pred_check
        %p271 = pneg %p270
      $region38: #{grouped_query_attention.1} parent=5 // pred_check_branch
        %273 = sbr.rel (%p271) target = $region40
      $region39: #{grouped_query_attention.1} parent=5 // pred_region
        // Predicated region
        $region41: #{grouped_query_attention.1} parent=39 // pred_check
          %p274 = pneg %p51
        $region42: #{grouped_query_attention.1} parent=39 // pred_check_branch
          %276 = sbr.rel (%p274) target = $region44
        $region43: #{grouped_query_attention.1} parent=39 // pred_region
          %p277 = scmp.lt.s32.totalorder %s24, 1
          %s278 = scalar_select %p277, %s24, 1
          %p279 = scmp.lt.s32.totalorder %s25, 1
          %s280 = scalar_select %p279, %s25, 1
          %s281 = smul.addr %s278, 2
          %s282 = sadd.s32 %s280, %s281
          %s283 = smul.addr %s282, 4
          %s284 = scalar_lea.vmem %s0, %s283
        $region44: #{grouped_query_attention.1} parent=39 // pred_fallthru
          _
        // Predicated region
        $region45: #{grouped_query_attention.1} parent=39 // pred_check
          %p285 = pneg %p77
        $region46: #{grouped_query_attention.1} parent=39 // pred_check_branch
          %287 = sbr.rel (%p285) target = $region48
        $region47: #{grouped_query_attention.1} parent=39 // pred_region
          %p288 = scmp.lt.s32.totalorder %s24, 1
          %s289 = scalar_select %p288, %s24, 1
          %s290 = smul.addr %s289, 2
          %s291 = smul.addr %s290, 4
          %s292 = scalar_lea.vmem %s1, %s291
        $region48: #{grouped_query_attention.1} parent=39 // pred_fallthru
          _
      $region40: #{grouped_query_attention.1} parent=5 // pred_fallthru
        _
      %p293 = scmp.le.s32.totalorder 1, %s17
      %p294 = scmp.lt.s32.totalorder %s17, 5
      %p295 = pnand %p293, %p294
      %p296 = pneg %p295
      // Predicated region
      $region49: #{grouped_query_attention.1} parent=5 // pred_check
        _
      $region50: #{grouped_query_attention.1} parent=5 // pred_check_branch
        %298 = sbr.rel (%p295) target = $region52
      $region51: #{grouped_query_attention.1} parent=5 // pred_region
        %s299 = ssub.s32 %s17, 1
        %p300 = scmp.lt.s32.totalorder %s26, 1
        %s301 = scalar_select %p300, %s26, 1
        %p302 = scmp.lt.s32.totalorder %s27, 1
        %s303 = scalar_select %p302, %s27, 1
        %s304 = smul.addr %s301, 2
        %s305 = sadd.s32 %s303, %s304
        %s306 = smul.addr %s305, 4
        %s307 = scalar_lea.vmem %s0, %s306
        %p308 = pneg %p57
        %p309 = pneg %p54
        %p310 = scmp.lt.s32.totalorder %s26, 1
        %s311 = scalar_select %p310, %s26, 1
        %s312 = smul.addr %s311, 2
        %s313 = smul.addr %s312, 4
        %s314 = scalar_lea.vmem %s1, %s313
        %p315 = pneg %p83
        %p316 = pneg %p80
        %p317 = pneg %p104
        %p318 = pneg %p101
        %p319 = pneg %p125
        %p320 = pneg %p122
        %p321 = pneg %p146
        %p322 = pneg %p143
        %p323 = pneg %p167
        %p324 = pneg %p164
        %p325 = pneg %p188
        %p326 = pneg %p185
        %p327 = pneg %p209
        %p328 = pneg %p206
        %p329 = pneg %p237
        %p330 = pneg %p234
        %s331 = sand.u32 %s224, 1
        %s332 = scalar_lea.sflag [#allocation9], %s331
        %s333 = sand.u32 %s224, 1
        %s334 = smul.addr %s333, 8
        %s335 = scalar_lea.vmem [#allocation8], %s334
        %p336 = scmp.lt.s32.totalorder %s26, 1
        %s337 = scalar_select %p336, %s26, 1
        %p338 = scmp.lt.s32.totalorder %s27, 1
        %s339 = scalar_select %p338, %s27, 1
        %s340 = smul.addr %s337, 2
        %s341 = sadd.s32 %s339, %s340
        %s342 = smul.addr %s341, 4
        %s343 = scalar_lea.vmem %s0, %s342
        %p344 = scmp.lt.s32.totalorder %s26, 1
        %s345 = scalar_select %p344, %s26, 1
        %s346 = smul.addr %s345, 2
        %s347 = smul.addr %s346, 4
        %s348 = scalar_lea.vmem %s1, %s347
        %s350 = smul.u32 %s27, 8
        %p351 = scmp.eq.s32.totalorder %s27, 0
        // Predicated region
        $region53: #{grouped_query_attention.1} parent=51 // pred_check
          %p352 = pneg %p351
        $region54: #{grouped_query_attention.1} parent=51 // pred_check_branch
          %354 = sbr.rel (%p352) target = $region56
        $region55: #{grouped_query_attention.1} parent=51 // pred_region
          %v355 = vld [vmem:[%s348] sm:$0xf]
          %v356 = vld [vmem:[%s348 + $0x4] sm:$0xf]
          %v357 = vld [vmem:[%s3] sm:$0xf]
          %v358 = vld [vmem:[%s3 + $0x4] sm:$0xf]
          %v359 = vld [vmem:[%s3 + $0x8] sm:$0xf]
          %v360 = vld [vmem:[%s3 + $0xc] sm:$0xf]
          %v363 = vunpack.c.l.b16 %v355
          %v364 = vunpack.c.l.b16 %v356
          %v365 = vpack.c.b16 %v364, %v363
          %v370 = vunpack.c.l.b16 %v357
          %v371 = vunpack.c.l.b16 %v358
          %v372 = vunpack.c.l.b16 %v359
          %v373 = vunpack.c.l.b16 %v360
          %v374 = vpack.c.b16 %v371, %v370
          %v375 = vpack.c.b16 %v373, %v372
          %vm378 = vcmask 261120
          %v380 = vsel %vm378, %v365, 0
          %382 = vmatpush.bf16.msra.mxu0 0
          %383 = vmatpush.bf16.msra.mxu0 0
          %384 = vmatpush.bf16.msra.mxu0 0
          %385 = vmatpush.bf16.msra.mxu0 0
          %386 = vmatpush.bf16.msra.mxu0 0
          %387 = vmatpush.bf16.msra.mxu0 0
          %388 = vmatpush.bf16.msra.mxu0 %v375
          %389 = vmatpush.bf16.msra.mxu0 %v374
          %390 = vmatmul.bf16.gmra.mxu0 %v380
          %v391 = vpop.f32.mrf.mxu0
          %v392 = vadd.f32 0.0, %v391
          %v393 = vpop.f32.mrf.mxu0
          %v394 = vadd.f32 0.0, %v393
          %395 = vdwg.mxu0
          %v396 = vld [vmem:[%s4] sm:$0xf]
          %v397 = vld [vmem:[%s4 + $0x4] sm:$0xf]
          %v398 = vld [vmem:[%s4 + $0x8] sm:$0xf]
          %v399 = vld [vmem:[%s4 + $0xc] sm:$0xf]
          %v404 = vunpack.c.l.b16 %v396
          %v405 = vunpack.c.l.b16 %v397
          %v406 = vunpack.c.l.b16 %v398
          %v407 = vunpack.c.l.b16 %v399
          %v408 = vpack.c.b16 %v405, %v404
          %v409 = vpack.c.b16 %v407, %v406
          %412 = vmatpush.bf16.msra.mxu0 0
          %413 = vmatpush.bf16.msra.mxu0 0
          %414 = vmatpush.bf16.msra.mxu0 0
          %415 = vmatpush.bf16.msra.mxu0 0
          %416 = vmatpush.bf16.msra.mxu0 0
          %417 = vmatpush.bf16.msra.mxu0 0
          %418 = vmatpush.bf16.msra.mxu0 %v409
          %419 = vmatpush.bf16.msra.mxu0 %v408
          %420 = vmatmul.bf16.gmra.mxu0 %v380
          %v421 = vpop.f32.mrf.mxu0
          %v422 = vadd.f32 0.0, %v421
          %v423 = vpop.f32.mrf.mxu0
          %v424 = vadd.f32 0.0, %v423
          %425 = vdwg.mxu0
          %v426 = vld [vmem:[%s6] sm:$0xff]
          %v427 = vld [vmem:[%s6 + $0x8] sm:$0xff]
          %v428 = vld [vmem:[%s7] sm:$0xff]
          %v429 = vld [vmem:[%s7 + $0x8] sm:$0xff]
          %v430 = vmul.f32 %v392, %v426
          %v431 = vmul.f32 %v394, %v427
          %434 = vrot.lane.b32.xlu0 %v392, 124
          %v435 = vpop.permute.xlu0 %434
          %436 = vrot.lane.b32.xlu0 %v394, 124
          %v437 = vpop.permute.xlu0 %436
          %440 = vrot.lane.b32.xlu0 %v392, 4
          %v441 = vpop.permute.xlu0 %440
          %442 = vrot.lane.b32.xlu0 %v394, 4
          %v443 = vpop.permute.xlu0 %442
          %vm446 = vcmask 31744
          %v447 = vsel %vm446, %v435, %v441
          %v448 = vsel %vm446, %v437, %v443
          %v449 = vmul.f32 %v447, %v428
          %v450 = vmul.f32 %v448, %v429
          %v451 = vadd.f32 %v430, %v449
          %v452 = vadd.f32 %v431, %v450
          %v453 = vpack.c.bf16 %v451, %v451
          %v454 = vpack.c.bf16 %v452, %v452
          %vm455 = vcmask 60416
          %456 = vst.msk [vmem:[#allocation2] sm:$0xf] %vm455, %v453
          %457 = vst.msk [vmem:[#allocation2 + $0x4] sm:$0xf] %vm455, %v454
          %460 = vrot.lane.b32.xlu0 %v426, 8
          %v461 = vpop.permute.xlu0 %460
          %462 = vrot.lane.b32.xlu0 %v427, 8
          %v463 = vpop.permute.xlu0 %462
          %v466 = vmul.f32 %v392, %v461
          %v467 = vmul.f32 %v394, %v463
          %468 = vrot.lane.b32.xlu0 %v392, 116
          %v469 = vpop.permute.xlu0 %468
          %470 = vrot.lane.b32.xlu0 %v394, 116
          %v471 = vpop.permute.xlu0 %470
          %v474 = vsel %vm446, %v469, %v435
          %v475 = vsel %vm446, %v471, %v437
          %v476 = vmul.f32 %v474, %v428
          %v477 = vmul.f32 %v475, %v429
          %480 = vrot.lane.b32.xlu0 %v476, 8
          %v481 = vpop.permute.xlu0 %480
          %482 = vrot.lane.b32.xlu0 %v477, 8
          %v483 = vpop.permute.xlu0 %482
          %v486 = vadd.f32 %v466, %v481
          %v487 = vadd.f32 %v467, %v483
          %v488 = vpack.c.bf16 %v486, %v486
          %v489 = vpack.c.bf16 %v487, %v487
          %vm490 = vcmask 126016
          %491 = vst.msk [vmem:[#allocation2] sm:$0xf] %vm490, %v488
          %492 = vst.msk [vmem:[#allocation2 + $0x4] sm:$0xf] %vm490, %v489
          %v493 = vpack.c.bf16 %v422, %v422
          %v494 = vpack.c.bf16 %v424, %v424
          %vm495 = vcmask 125952
          %496 = vst.msk [vmem:[#allocation3] sm:$0xf] %vm495, %v493
          %497 = vst.msk [vmem:[#allocation3 + $0x4] sm:$0xf] %vm495, %v494
        $region56: #{grouped_query_attention.1} parent=51 // pred_fallthru
          _
        %v498 = vld [vmem:[%s343] sm:$0xf]
        %v499 = vld [vmem:[%s2] sm:$0xf]
        %v500 = vld [vmem:[%s2 + $0x4] sm:$0xf]
        %v501 = vld [vmem:[%s2 + $0x8] sm:$0xf]
        %v502 = vld [vmem:[%s2 + $0xc] sm:$0xf]
        %v507 = vunpack.c.l.b16 %v499
        %v508 = vunpack.c.l.b16 %v500
        %v509 = vunpack.c.l.b16 %v501
        %v510 = vunpack.c.l.b16 %v502
        %v511 = vpack.c.b16 %v508, %v507
        %v512 = vpack.c.b16 %v510, %v509
        %vm515 = vcmask 261120
        %v517 = vsel %vm515, %v498, 0
        %519 = vmatpush.bf16.msra.mxu0 0
        %520 = vmatpush.bf16.msra.mxu0 0
        %521 = vmatpush.bf16.msra.mxu0 0
        %522 = vmatpush.bf16.msra.mxu0 0
        %523 = vmatpush.bf16.msra.mxu0 0
        %524 = vmatpush.bf16.msra.mxu0 0
        %525 = vmatpush.bf16.msra.mxu0 %v512
        %526 = vmatpush.bf16.msra.mxu0 %v511
        %527 = vmatmul.bf16.gmra.mxu0 %v517
        %v528 = vpop.f32.mrf.mxu0
        %v529 = vadd.f32 0.0, %v528
        %v530 = vpop.f32.mrf.mxu0
        %531 = vdwg.mxu0
        %s532 = scalar_lea.vmem %s6, %s350
        %v533 = vld [vmem:[%s532] sm:$0xff]
        %s534 = scalar_lea.vmem %s7, %s350
        %v535 = vld [vmem:[%s534] sm:$0xff]
        %v536 = vlaneseq
        %v537 = vshrl.u32 %v536, 7
        %v538 = vlaneseq
        %v539 = vand.u32 %v538, 127
        %v540 = vsub.s32 %v539, %v537
        %v541 = vmul.f32 %v529, %v533
        %543 = vrot.lane.b32.xlu0 %v529, 124
        %v544 = vpop.permute.xlu0 %543
        %546 = vrot.lane.b32.xlu0 %v529, 4
        %v547 = vpop.permute.xlu0 %546
        %vm549 = vcmask 31744
        %v550 = vsel %vm549, %v544, %v547
        %v551 = vmul.f32 %v550, %v535
        %v552 = vadd.f32 %v541, %v551
        %v553 = vmul.f32 %v552, 0.35355338
        %v554 = vpack.c.bf16 %v553, %v553
        %556 = vrot.lane.b32.xlu0 %v533, 8
        %v557 = vpop.permute.xlu0 %556
        %v559 = vmul.f32 %v529, %v557
        %560 = vrot.lane.b32.xlu0 %v529, 116
        %v561 = vpop.permute.xlu0 %560
        %v563 = vsel %vm549, %v561, %v544
        %v564 = vmul.f32 %v563, %v535
        %566 = vrot.lane.b32.xlu0 %v564, 8
        %v567 = vpop.permute.xlu0 %566
        %v569 = vadd.f32 %v559, %v567
        %v570 = vmul.f32 %v569, 0.35355338
        %v571 = vpack.c.bf16 %v570, %v570
        %v573 = vunpack.c.l.b16 %v571
        %v574 = vpack.c.b16 %v573, %v573
        %575 = vrot.lane.b32.xlu0 %v574, 120
        %v576 = vpop.permute.xlu0 %575
        %vm577 = vcmask 1043456
        %v580 = vsel %vm577, %v554, %v576
        %vm581 = vcmask 7168
        %582 = vst.msk [vmem:[#allocation5] sm:$0xff] %vm581, -1e+30
        %583 = vst.msk [vmem:[#allocation5 + $0x8] sm:$0xff] %vm581, -1e+30
        %584 = vst.msk [vmem:[#allocation6] sm:$0xff] %vm581, 0.0
        %585 = vst.msk [vmem:[#allocation6 + $0x8] sm:$0xff] %vm581, 0.0
        %vm586 = vcmask 64512
        %587 = vst.msk [vmem:[#allocation7] sm:$0xff] %vm586, 0.0
        %588 = vst.msk [vmem:[#allocation7 + $0x8] sm:$0xff] %vm586, 0.0
        %s589 = sadd.s32 %s350, 7
        %p590 = scmp.ge.s32.totalorder %s589, 0
        // Predicated region
        $region57: #{grouped_query_attention.1} parent=51 // pred_check
          %p591 = pneg %p590
        $region58: #{grouped_query_attention.1} parent=51 // pred_check_branch
          %593 = sbr.rel (%p591) target = $region60
        $region59: #{grouped_query_attention.1} parent=51 // pred_region
          %v594 = vld [vmem:[#allocation2] sm:$0xf]
          %v595 = vld [vmem:[#allocation3] sm:$0xf]
          %v596 = vstv %s350
          %vm597 = vcmp.gt.s32.totalorder %v540, %v596
          %v598 = vsel %vm597, -1e+30, 0.0
          %v599 = vsel %vm586, %v580, 0
          %v602 = vsel %vm586, %v594, 0
          %604 = vmatpush.bf16.xpose.msra.mxu0 0
          %605 = vmatpush.bf16.xpose.msra.mxu0 0
          %606 = vmatpush.bf16.xpose.msra.mxu0 0
          %607 = vmatpush.bf16.xpose.msra.mxu0 0
          %608 = vmatpush.bf16.xpose.msra.mxu0 0
          %609 = vmatpush.bf16.xpose.msra.mxu0 0
          %610 = vmatpush.bf16.xpose.msra.mxu0 0
          %611 = vmatpush.bf16.xpose.msra.mxu0 %v602
          %612 = vmatmul.bf16.gmra.mxu0 %v599
          %v613 = vpop.f32.mrf.mxu0
          %v614 = vadd.f32 %v598, %v613
          %v615 = vpop.f32.mrf.mxu0
          %v616 = vadd.f32 %v598, %v615
          %617 = vdwg.mxu0
          %v618 = vld [vmem:[#allocation5] sm:$0xff]
          %v619 = vld [vmem:[#allocation5 + $0x8] sm:$0xff]
          %v620 = vsel %vm586, %v614, -inf
          %621 = vmax.xlane.f32.xlu0 %v620
          %v622 = vpop.xlane.xlu0 %621
          %v623 = vsel %vm586, %v616, -inf
          %624 = vmax.xlane.f32.xlu0 %v623
          %v625 = vpop.xlane.xlu0 %624
          %v626 = vmax.f32 %v618, %v622
          %v627 = vmax.f32 %v619, %v625
          %v628 = vsub.f32 %v618, %v626
          %v629 = vsub.f32 %v619, %v627
          %v630 = vmul.f32 %v628, 1.442695
          %v631 = vpow.pop %v630
          %v632 = vmul.f32 %v629, 1.442695
          %v633 = vpow.pop %v632
          %635 = vset.pattern.permute.xlu0 0
          %636 = vperm.xlu0 %635, %v626
          %v637 = vpop.permute.xlu0 %636
          %640 = vset.pattern.permute.xlu0 0
          %641 = vperm.xlu0 %640, %v627
          %v642 = vpop.permute.xlu0 %641
          %v644 = vsub.f32 %v614, %v637
          %v645 = vsub.f32 %v616, %v642
          %v646 = vmul.f32 %v644, 1.442695
          %v647 = vpow.pop %v646
          %v648 = vmul.f32 %v645, 1.442695
          %v649 = vpow.pop %v648
          %v650 = vld [vmem:[#allocation6] sm:$0xff]
          %v651 = vld [vmem:[#allocation6 + $0x8] sm:$0xff]
          %v652 = vmul.f32 %v631, %v650
          %v653 = vmul.f32 %v633, %v651
          %v654 = vsel %vm586, %v647, 0.0
          %655 = vadd.xlane.f32.xlu0 %v654
          %v656 = vpop.xlane.xlu0 %655
          %v657 = vsel %vm586, %v649, 0.0
          %658 = vadd.xlane.f32.xlu0 %v657
          %v659 = vpop.xlane.xlu0 %658
          %v660 = vadd.f32 %v652, %v656
          %v661 = vadd.f32 %v653, %v659
          %662 = vst.msk [vmem:[#allocation6] sm:$0xff] %vm581, %v660
          %663 = vst.msk [vmem:[#allocation6 + $0x8] sm:$0xff] %vm581, %v661
          %v664 = vld [vmem:[#allocation7] sm:$0xff]
          %v665 = vld [vmem:[#allocation7 + $0x8] sm:$0xff]
          %667 = vset.pattern.permute.xlu0 0
          %668 = vperm.xlu0 %667, %v631
          %v669 = vpop.permute.xlu0 %668
          %672 = vset.pattern.permute.xlu0 0
          %673 = vperm.xlu0 %672, %v633
          %v674 = vpop.permute.xlu0 %673
          %v676 = vmul.f32 %v669, %v664
          %v677 = vmul.f32 %v674, %v665
          %v678 = vpack.c.bf16 %v649, %v647
          %v680 = vsel %vm586, %v678, 0
          %v683 = vsel %vm577, %v595, 0
          %685 = vmatpush.bf16.msra.mxu0 0
          %686 = vmatpush.bf16.msra.mxu0 0
          %687 = vmatpush.bf16.msra.mxu0 0
          %688 = vmatpush.bf16.msra.mxu0 0
          %689 = vmatpush.bf16.msra.mxu0 0
          %690 = vmatpush.bf16.msra.mxu0 0
          %691 = vmatpush.bf16.msra.mxu0 0
          %692 = vmatpush.bf16.msra.mxu0 %v683
          %693 = vmatmul.bf16.gmra.mxu0 %v680
          %v694 = vpop.f32.mrf.mxu0
          %v695 = vadd.f32 0.0, %v694
          %v696 = vpop.f32.mrf.mxu0
          %v697 = vadd.f32 0.0, %v696
          %698 = vdwg.mxu0
          %v699 = vadd.f32 %v676, %v695
          %v700 = vadd.f32 %v677, %v697
          %701 = vst.msk [vmem:[#allocation7] sm:$0xff] %vm586, %v699
          %702 = vst.msk [vmem:[#allocation7 + $0x8] sm:$0xff] %vm586, %v700
          %703 = vst.msk [vmem:[#allocation5] sm:$0xff] %vm581, %v626
          %704 = vst.msk [vmem:[#allocation5 + $0x8] sm:$0xff] %vm581, %v627
        $region60: #{grouped_query_attention.1} parent=51 // pred_fallthru
          _
        %p705 = scmp.ge.s32.totalorder %s589, 8
        // Predicated region
        $region61: #{grouped_query_attention.1} parent=51 // pred_check
          %p706 = pneg %p705
        $region62: #{grouped_query_attention.1} parent=51 // pred_check_branch
          %708 = sbr.rel (%p706) target = $region64
        $region63: #{grouped_query_attention.1} parent=51 // pred_region
          %v709 = vld [vmem:[#allocation2 + $0x4] sm:$0xf]
          %v710 = vld [vmem:[#allocation3 + $0x4] sm:$0xf]
          %s711 = ssub.s32 %s350, 8
          %v712 = vstv %s711
          %vm713 = vcmp.gt.s32.totalorder %v540, %v712
          %v714 = vsel %vm713, -1e+30, 0.0
          %v715 = vsel %vm586, %v580, 0
          %v718 = vsel %vm586, %v709, 0
          %720 = vmatpush.bf16.xpose.msra.mxu0 0
          %721 = vmatpush.bf16.xpose.msra.mxu0 0
          %722 = vmatpush.bf16.xpose.msra.mxu0 0
          %723 = vmatpush.bf16.xpose.msra.mxu0 0
          %724 = vmatpush.bf16.xpose.msra.mxu0 0
          %725 = vmatpush.bf16.xpose.msra.mxu0 0
          %726 = vmatpush.bf16.xpose.msra.mxu0 0
          %727 = vmatpush.bf16.xpose.msra.mxu0 %v718
          %728 = vmatmul.bf16.gmra.mxu0 %v715
          %v729 = vpop.f32.mrf.mxu0
          %v730 = vadd.f32 %v714, %v729
          %v731 = vpop.f32.mrf.mxu0
          %v732 = vadd.f32 %v714, %v731
          %733 = vdwg.mxu0
          %v734 = vld [vmem:[#allocation5] sm:$0xff]
          %v735 = vld [vmem:[#allocation5 + $0x8] sm:$0xff]
          %v736 = vsel %vm586, %v730, -inf
          %737 = vmax.xlane.f32.xlu0 %v736
          %v738 = vpop.xlane.xlu0 %737
          %v739 = vsel %vm586, %v732, -inf
          %740 = vmax.xlane.f32.xlu0 %v739
          %v741 = vpop.xlane.xlu0 %740
          %v742 = vmax.f32 %v734, %v738
          %v743 = vmax.f32 %v735, %v741
          %v744 = vsub.f32 %v734, %v742
          %v745 = vsub.f32 %v735, %v743
          %v746 = vmul.f32 %v744, 1.442695
          %v747 = vpow.pop %v746
          %v748 = vmul.f32 %v745, 1.442695
          %v749 = vpow.pop %v748
          %751 = vset.pattern.permute.xlu0 0
          %752 = vperm.xlu0 %751, %v742
          %v753 = vpop.permute.xlu0 %752
          %756 = vset.pattern.permute.xlu0 0
          %757 = vperm.xlu0 %756, %v743
          %v758 = vpop.permute.xlu0 %757
          %v760 = vsub.f32 %v730, %v753
          %v761 = vsub.f32 %v732, %v758
          %v762 = vmul.f32 %v760, 1.442695
          %v763 = vpow.pop %v762
          %v764 = vmul.f32 %v761, 1.442695
          %v765 = vpow.pop %v764
          %v766 = vld [vmem:[#allocation6] sm:$0xff]
          %v767 = vld [vmem:[#allocation6 + $0x8] sm:$0xff]
          %v768 = vmul.f32 %v747, %v766
          %v769 = vmul.f32 %v749, %v767
          %v770 = vsel %vm586, %v763, 0.0
          %771 = vadd.xlane.f32.xlu0 %v770
          %v772 = vpop.xlane.xlu0 %771
          %v773 = vsel %vm586, %v765, 0.0
          %774 = vadd.xlane.f32.xlu0 %v773
          %v775 = vpop.xlane.xlu0 %774
          %v776 = vadd.f32 %v768, %v772
          %v777 = vadd.f32 %v769, %v775
          %778 = vst.msk [vmem:[#allocation6] sm:$0xff] %vm581, %v776
          %779 = vst.msk [vmem:[#allocation6 + $0x8] sm:$0xff] %vm581, %v777
          %v780 = vld [vmem:[#allocation7] sm:$0xff]
          %v781 = vld [vmem:[#allocation7 + $0x8] sm:$0xff]
          %783 = vset.pattern.permute.xlu0 0
          %784 = vperm.xlu0 %783, %v747
          %v785 = vpop.permute.xlu0 %784
          %788 = vset.pattern.permute.xlu0 0
          %789 = vperm.xlu0 %788, %v749
          %v790 = vpop.permute.xlu0 %789
          %v792 = vmul.f32 %v785, %v780
          %v793 = vmul.f32 %v790, %v781
          %v794 = vpack.c.bf16 %v765, %v763
          %v796 = vsel %vm586, %v794, 0
          %v799 = vsel %vm577, %v710, 0
          %801 = vmatpush.bf16.msra.mxu0 0
          %802 = vmatpush.bf16.msra.mxu0 0
          %803 = vmatpush.bf16.msra.mxu0 0
          %804 = vmatpush.bf16.msra.mxu0 0
          %805 = vmatpush.bf16.msra.mxu0 0
          %806 = vmatpush.bf16.msra.mxu0 0
          %807 = vmatpush.bf16.msra.mxu0 0
          %808 = vmatpush.bf16.msra.mxu0 %v799
          %809 = vmatmul.bf16.gmra.mxu0 %v796
          %v810 = vpop.f32.mrf.mxu0
          %v811 = vadd.f32 0.0, %v810
          %v812 = vpop.f32.mrf.mxu0
          %v813 = vadd.f32 0.0, %v812
          %814 = vdwg.mxu0
          %v815 = vadd.f32 %v792, %v811
          %v816 = vadd.f32 %v793, %v813
          %817 = vst.msk [vmem:[#allocation7] sm:$0xff] %vm586, %v815
          %818 = vst.msk [vmem:[#allocation7 + $0x8] sm:$0xff] %vm586, %v816
          %819 = vst.msk [vmem:[#allocation5] sm:$0xff] %vm581, %v742
          %820 = vst.msk [vmem:[#allocation5 + $0x8] sm:$0xff] %vm581, %v743
        $region64: #{grouped_query_attention.1} parent=51 // pred_fallthru
          _
        %v821 = vld [vmem:[#allocation7] sm:$0xff]
        %v822 = vld [vmem:[#allocation7 + $0x8] sm:$0xff]
        %v823 = vld [vmem:[#allocation6] sm:$0xff]
        %v824 = vld [vmem:[#allocation6 + $0x8] sm:$0xff]
        %v825 = vrcp.pop %v823
        %v826 = vrcp.pop %v824
        %828 = vset.pattern.permute.xlu0 0
        %829 = vperm.xlu0 %828, %v825
        %v830 = vpop.permute.xlu0 %829
        %833 = vset.pattern.permute.xlu0 0
        %834 = vperm.xlu0 %833, %v826
        %v835 = vpop.permute.xlu0 %834
        %v837 = vmul.f32 %v821, %v830
        %v838 = vmul.f32 %v822, %v835
        %v839 = vpack.c.bf16 %v837, %v837
        %vm840 = vcmask 60416
        %841 = vst.msk [vmem:[#allocation4] sm:$0xf] %vm840, %v839
        %v842 = vpack.c.bf16 %v838, %v838
        %844 = vrot.lane.b32.xlu0 %v842, 8
        %v845 = vpop.permute.xlu0 %844
        %vm847 = vcmask 126016
        %848 = vst.msk [vmem:[#allocation4] sm:$0xf] %vm847, %v845
        %849 = vrot.lane.b32.xlu0 %v533, 16
        %v850 = vpop.permute.xlu0 %849
        %v852 = vmul.f32 %v529, %v850
        %853 = vrot.lane.b32.xlu0 %v529, 108
        %v854 = vpop.permute.xlu0 %853
        %v856 = vsel %vm549, %v854, %v561
        %v857 = vmul.f32 %v856, %v535
        %859 = vrot.lane.b32.xlu0 %v857, 16
        %v860 = vpop.permute.xlu0 %859
        %v862 = vadd.f32 %v852, %v860
        %v863 = vmul.f32 %v862, 0.35355338
        %v864 = vpack.c.bf16 %v863, %v863
        %865 = vrot.lane.b32.xlu0 %v533, 24
        %v866 = vpop.permute.xlu0 %865
        %v868 = vmul.f32 %v529, %v866
        %869 = vrot.lane.b32.xlu0 %v529, 100
        %v870 = vpop.permute.xlu0 %869
        %v872 = vsel %vm549, %v870, %v854
        %v873 = vmul.f32 %v872, %v535
        %875 = vrot.lane.b32.xlu0 %v873, 24
        %v876 = vpop.permute.xlu0 %875
        %v878 = vadd.f32 %v868, %v876
        %v879 = vmul.f32 %v878, 0.35355338
        %v880 = vpack.c.bf16 %v879, %v879
        %v882 = vunpack.c.l.b16 %v880
        %v883 = vpack.c.b16 %v882, %v882
        %884 = vrot.lane.b32.xlu0 %v883, 120
        %v885 = vpop.permute.xlu0 %884
        %v888 = vsel %vm577, %v864, %v885
        %889 = vst.msk [vmem:[#allocation5] sm:$0xff] %vm581, -1e+30
        %890 = vst.msk [vmem:[#allocation5 + $0x8] sm:$0xff] %vm581, -1e+30
        %891 = vst.msk [vmem:[#allocation6] sm:$0xff] %vm581, 0.0
        %892 = vst.msk [vmem:[#allocation6 + $0x8] sm:$0xff] %vm581, 0.0
        %893 = vst.msk [vmem:[#allocation7] sm:$0xff] %vm586, 0.0
        %894 = vst.msk [vmem:[#allocation7 + $0x8] sm:$0xff] %vm586, 0.0
        // Predicated region
        $region65: #{grouped_query_attention.1} parent=51 // pred_check
          %p895 = pneg %p590
        $region66: #{grouped_query_attention.1} parent=51 // pred_check_branch
          %897 = sbr.rel (%p895) target = $region68
        $region67: #{grouped_query_attention.1} parent=51 // pred_region
          %v898 = vld [vmem:[#allocation2] sm:$0xf]
          %v899 = vld [vmem:[#allocation3] sm:$0xf]
          %v900 = vstv %s350
          %vm901 = vcmp.gt.s32.totalorder %v540, %v900
          %v902 = vsel %vm901, -1e+30, 0.0
          %904 = vrot.lane.b32.xlu0 %v888, 112
          %v905 = vpop.permute.xlu0 %904
          %v907 = vunpack.c.l.b16 %v898
          %v908 = vpack.c.b16 %v907, %v907
          %909 = vrot.lane.b32.xlu0 %v908, 120
          %v910 = vpop.permute.xlu0 %909
          %v912 = vsel %vm586, %v905, 0
          %v915 = vsel %vm586, %v910, 0
          %917 = vmatpush.bf16.xpose.msra.mxu0 0
          %918 = vmatpush.bf16.xpose.msra.mxu0 0
          %919 = vmatpush.bf16.xpose.msra.mxu0 0
          %920 = vmatpush.bf16.xpose.msra.mxu0 0
          %921 = vmatpush.bf16.xpose.msra.mxu0 0
          %922 = vmatpush.bf16.xpose.msra.mxu0 0
          %923 = vmatpush.bf16.xpose.msra.mxu0 0
          %924 = vmatpush.bf16.xpose.msra.mxu0 %v915
          %925 = vmatmul.bf16.gmra.mxu0 %v912
          %v926 = vpop.f32.mrf.mxu0
          %v927 = vadd.f32 %v902, %v926
          %v928 = vpop.f32.mrf.mxu0
          %v929 = vadd.f32 %v902, %v928
          %930 = vdwg.mxu0
          %v931 = vld [vmem:[#allocation5] sm:$0xff]
          %v932 = vld [vmem:[#allocation5 + $0x8] sm:$0xff]
          %v933 = vsel %vm586, %v927, -inf
          %934 = vmax.xlane.f32.xlu0 %v933
          %v935 = vpop.xlane.xlu0 %934
          %v936 = vsel %vm586, %v929, -inf
          %937 = vmax.xlane.f32.xlu0 %v936
          %v938 = vpop.xlane.xlu0 %937
          %v939 = vmax.f32 %v931, %v935
          %v940 = vmax.f32 %v932, %v938
          %v941 = vsub.f32 %v931, %v939
          %v942 = vsub.f32 %v932, %v940
          %v943 = vmul.f32 %v941, 1.442695
          %v944 = vpow.pop %v943
          %v945 = vmul.f32 %v942, 1.442695
          %v946 = vpow.pop %v945
          %948 = vset.pattern.permute.xlu0 0
          %949 = vperm.xlu0 %948, %v939
          %v950 = vpop.permute.xlu0 %949
          %953 = vset.pattern.permute.xlu0 0
          %954 = vperm.xlu0 %953, %v940
          %v955 = vpop.permute.xlu0 %954
          %v957 = vsub.f32 %v927, %v950
          %v958 = vsub.f32 %v929, %v955
          %v959 = vmul.f32 %v957, 1.442695
          %v960 = vpow.pop %v959
          %v961 = vmul.f32 %v958, 1.442695
          %v962 = vpow.pop %v961
          %v963 = vld [vmem:[#allocation6] sm:$0xff]
          %v964 = vld [vmem:[#allocation6 + $0x8] sm:$0xff]
          %v965 = vmul.f32 %v944, %v963
          %v966 = vmul.f32 %v946, %v964
          %v967 = vsel %vm586, %v960, 0.0
          %968 = vadd.xlane.f32.xlu0 %v967
          %v969 = vpop.xlane.xlu0 %968
          %v970 = vsel %vm586, %v962, 0.0
          %971 = vadd.xlane.f32.xlu0 %v970
          %v972 = vpop.xlane.xlu0 %971
          %v973 = vadd.f32 %v965, %v969
          %v974 = vadd.f32 %v966, %v972
          %975 = vst.msk [vmem:[#allocation6] sm:$0xff] %vm581, %v973
          %976 = vst.msk [vmem:[#allocation6 + $0x8] sm:$0xff] %vm581, %v974
          %v977 = vld [vmem:[#allocation7] sm:$0xff]
          %v978 = vld [vmem:[#allocation7 + $0x8] sm:$0xff]
          %980 = vset.pattern.permute.xlu0 0
          %981 = vperm.xlu0 %980, %v944
          %v982 = vpop.permute.xlu0 %981
          %985 = vset.pattern.permute.xlu0 0
          %986 = vperm.xlu0 %985, %v946
          %v987 = vpop.permute.xlu0 %986
          %v989 = vmul.f32 %v982, %v977
          %v990 = vmul.f32 %v987, %v978
          %v991 = vpack.c.bf16 %v962, %v960
          %v993 = vunpack.c.l.b16 %v899
          %v994 = vpack.c.b16 %v993, %v993
          %995 = vrot.lane.b32.xlu0 %v994, 120
          %v996 = vpop.permute.xlu0 %995
          %v998 = vsel %vm586, %v991, 0
          %v1001 = vsel %vm577, %v996, 0
          %1003 = vmatpush.bf16.msra.mxu0 0
          %1004 = vmatpush.bf16.msra.mxu0 0
          %1005 = vmatpush.bf16.msra.mxu0 0
          %1006 = vmatpush.bf16.msra.mxu0 0
          %1007 = vmatpush.bf16.msra.mxu0 0
          %1008 = vmatpush.bf16.msra.mxu0 0
          %1009 = vmatpush.bf16.msra.mxu0 0
          %1010 = vmatpush.bf16.msra.mxu0 %v1001
          %1011 = vmatmul.bf16.gmra.mxu0 %v998
          %v1012 = vpop.f32.mrf.mxu0
          %v1013 = vadd.f32 0.0, %v1012
          %v1014 = vpop.f32.mrf.mxu0
          %v1015 = vadd.f32 0.0, %v1014
          %1016 = vdwg.mxu0
          %v1017 = vadd.f32 %v989, %v1013
          %v1018 = vadd.f32 %v990, %v1015
          %1019 = vst.msk [vmem:[#allocation7] sm:$0xff] %vm586, %v1017
          %1020 = vst.msk [vmem:[#allocation7 + $0x8] sm:$0xff] %vm586, %v1018
          %1021 = vst.msk [vmem:[#allocation5] sm:$0xff] %vm581, %v939
          %1022 = vst.msk [vmem:[#allocation5 + $0x8] sm:$0xff] %vm581, %v940
        $region68: #{grouped_query_attention.1} parent=51 // pred_fallthru
          _
        // Predicated region
        $region69: #{grouped_query_attention.1} parent=51 // pred_check
          %p1023 = pneg %p705
        $region70: #{grouped_query_attention.1} parent=51 // pred_check_branch
          %1025 = sbr.rel (%p1023) target = $region72
        $region71: #{grouped_query_attention.1} parent=51 // pred_region
          %v1026 = vld [vmem:[#allocation2 + $0x4] sm:$0xf]
          %v1027 = vld [vmem:[#allocation3 + $0x4] sm:$0xf]
          %s1028 = ssub.s32 %s350, 8
          %v1029 = vstv %s1028
          %vm1030 = vcmp.gt.s32.totalorder %v540, %v1029
          %v1031 = vsel %vm1030, -1e+30, 0.0
          %1033 = vrot.lane.b32.xlu0 %v888, 112
          %v1034 = vpop.permute.xlu0 %1033
          %v1036 = vunpack.c.l.b16 %v1026
          %v1037 = vpack.c.b16 %v1036, %v1036
          %1038 = vrot.lane.b32.xlu0 %v1037, 120
          %v1039 = vpop.permute.xlu0 %1038
          %v1041 = vsel %vm586, %v1034, 0
          %v1044 = vsel %vm586, %v1039, 0
          %1046 = vmatpush.bf16.xpose.msra.mxu0 0
          %1047 = vmatpush.bf16.xpose.msra.mxu0 0
          %1048 = vmatpush.bf16.xpose.msra.mxu0 0
          %1049 = vmatpush.bf16.xpose.msra.mxu0 0
          %1050 = vmatpush.bf16.xpose.msra.mxu0 0
          %1051 = vmatpush.bf16.xpose.msra.mxu0 0
          %1052 = vmatpush.bf16.xpose.msra.mxu0 0
          %1053 = vmatpush.bf16.xpose.msra.mxu0 %v1044
          %1054 = vmatmul.bf16.gmra.mxu0 %v1041
          %v1055 = vpop.f32.mrf.mxu0
          %v1056 = vadd.f32 %v1031, %v1055
          %v1057 = vpop.f32.mrf.mxu0
          %v1058 = vadd.f32 %v1031, %v1057
          %1059 = vdwg.mxu0
          %v1060 = vld [vmem:[#allocation5] sm:$0xff]
          %v1061 = vld [vmem:[#allocation5 + $0x8] sm:$0xff]
          %v1062 = vsel %vm586, %v1056, -inf
          %1063 = vmax.xlane.f32.xlu0 %v1062
          %v1064 = vpop.xlane.xlu0 %1063
          %v1065 = vsel %vm586, %v1058, -inf
          %1066 = vmax.xlane.f32.xlu0 %v1065
          %v1067 = vpop.xlane.xlu0 %1066
          %v1068 = vmax.f32 %v1060, %v1064
          %v1069 = vmax.f32 %v1061, %v1067
          %v1070 = vsub.f32 %v1060, %v1068
          %v1071 = vsub.f32 %v1061, %v1069
          %v1072 = vmul.f32 %v1070, 1.442695
          %v1073 = vpow.pop %v1072
          %v1074 = vmul.f32 %v1071, 1.442695
          %v1075 = vpow.pop %v1074
          %1077 = vset.pattern.permute.xlu0 0
          %1078 = vperm.xlu0 %1077, %v1068
          %v1079 = vpop.permute.xlu0 %1078
          %1082 = vset.pattern.permute.xlu0 0
          %1083 = vperm.xlu0 %1082, %v1069
          %v1084 = vpop.permute.xlu0 %1083
          %v1086 = vsub.f32 %v1056, %v1079
          %v1087 = vsub.f32 %v1058, %v1084
          %v1088 = vmul.f32 %v1086, 1.442695
          %v1089 = vpow.pop %v1088
          %v1090 = vmul.f32 %v1087, 1.442695
          %v1091 = vpow.pop %v1090
          %v1092 = vld [vmem:[#allocation6] sm:$0xff]
          %v1093 = vld [vmem:[#allocation6 + $0x8] sm:$0xff]
          %v1094 = vmul.f32 %v1073, %v1092
          %v1095 = vmul.f32 %v1075, %v1093
          %v1096 = vsel %vm586, %v1089, 0.0
          %1097 = vadd.xlane.f32.xlu0 %v1096
          %v1098 = vpop.xlane.xlu0 %1097
          %v1099 = vsel %vm586, %v1091, 0.0
          %1100 = vadd.xlane.f32.xlu0 %v1099
          %v1101 = vpop.xlane.xlu0 %1100
          %v1102 = vadd.f32 %v1094, %v1098
          %v1103 = vadd.f32 %v1095, %v1101
          %1104 = vst.msk [vmem:[#allocation6] sm:$0xff] %vm581, %v1102
          %1105 = vst.msk [vmem:[#allocation6 + $0x8] sm:$0xff] %vm581, %v1103
          %v1106 = vld [vmem:[#allocation7] sm:$0xff]
          %v1107 = vld [vmem:[#allocation7 + $0x8] sm:$0xff]
          %1109 = vset.pattern.permute.xlu0 0
          %1110 = vperm.xlu0 %1109, %v1073
          %v1111 = vpop.permute.xlu0 %1110
          %1114 = vset.pattern.permute.xlu0 0
          %1115 = vperm.xlu0 %1114, %v1075
          %v1116 = vpop.permute.xlu0 %1115
          %v1118 = vmul.f32 %v1111, %v1106
          %v1119 = vmul.f32 %v1116, %v1107
          %v1120 = vpack.c.bf16 %v1091, %v1089
          %v1122 = vunpack.c.l.b16 %v1027
          %v1123 = vpack.c.b16 %v1122, %v1122
          %1124 = vrot.lane.b32.xlu0 %v1123, 120
          %v1125 = vpop.permute.xlu0 %1124
          %v1127 = vsel %vm586, %v1120, 0
          %v1130 = vsel %vm577, %v1125, 0
          %1132 = vmatpush.bf16.msra.mxu0 0
          %1133 = vmatpush.bf16.msra.mxu0 0
          %1134 = vmatpush.bf16.msra.mxu0 0
          %1135 = vmatpush.bf16.msra.mxu0 0
          %1136 = vmatpush.bf16.msra.mxu0 0
          %1137 = vmatpush.bf16.msra.mxu0 0
          %1138 = vmatpush.bf16.msra.mxu0 0
          %1139 = vmatpush.bf16.msra.mxu0 %v1130
          %1140 = vmatmul.bf16.gmra.mxu0 %v1127
          %v1141 = vpop.f32.mrf.mxu0
          %v1142 = vadd.f32 0.0, %v1141
          %v1143 = vpop.f32.mrf.mxu0
          %v1144 = vadd.f32 0.0, %v1143
          %1145 = vdwg.mxu0
          %v1146 = vadd.f32 %v1118, %v1142
          %v1147 = vadd.f32 %v1119, %v1144
          %1148 = vst.msk [vmem:[#allocation7] sm:$0xff] %vm586, %v1146
          %1149 = vst.msk [vmem:[#allocation7 + $0x8] sm:$0xff] %vm586, %v1147
          %1150 = vst.msk [vmem:[#allocation5] sm:$0xff] %vm581, %v1068
          %1151 = vst.msk [vmem:[#allocation5 + $0x8] sm:$0xff] %vm581, %v1069
        $region72: #{grouped_query_attention.1} parent=51 // pred_fallthru
          _
        %v1152 = vld [vmem:[#allocation7] sm:$0xff]
        %v1153 = vld [vmem:[#allocation7 + $0x8] sm:$0xff]
        %v1154 = vld [vmem:[#allocation6] sm:$0xff]
        %v1155 = vld [vmem:[#allocation6 + $0x8] sm:$0xff]
        %v1156 = vrcp.pop %v1154
        %v1157 = vrcp.pop %v1155
        %1159 = vset.pattern.permute.xlu0 0
        %1160 = vperm.xlu0 %1159, %v1156
        %v1161 = vpop.permute.xlu0 %1160
        %1164 = vset.pattern.permute.xlu0 0
        %1165 = vperm.xlu0 %1164, %v1157
        %v1166 = vpop.permute.xlu0 %1165
        %v1168 = vmul.f32 %v1152, %v1161
        %v1169 = vmul.f32 %v1153, %v1166
        %v1170 = vpack.c.bf16 %v1168, %v1168
        %1172 = vrot.lane.b32.xlu0 %v1170, 16
        %v1173 = vpop.permute.xlu0 %1172
        %vm1175 = vcmask 191616
        %1176 = vst.msk [vmem:[#allocation4] sm:$0xf] %vm1175, %v1173
        %v1177 = vpack.c.bf16 %v1169, %v1169
        %1179 = vrot.lane.b32.xlu0 %v1177, 24
        %v1180 = vpop.permute.xlu0 %1179
        %vm1182 = vcmask 257216
        %1183 = vst.msk [vmem:[#allocation4] sm:$0xf] %vm1182, %v1180
        %v1184 = vld [vmem:[#allocation4] sm:$0xf]
        %v1185 = vld [vmem:[%s5] sm:$0xf]
        %v1186 = vld [vmem:[%s5 + $0x4] sm:$0xf]
        %v1187 = vld [vmem:[%s5 + $0x8] sm:$0xf]
        %v1188 = vld [vmem:[%s5 + $0xc] sm:$0xf]
        %v1193 = vunpack.c.l.b16 %v1185
        %v1194 = vunpack.c.l.b16 %v1186
        %v1195 = vunpack.c.l.b16 %v1187
        %v1196 = vunpack.c.l.b16 %v1188
        %v1197 = vpack.c.b16 %v1194, %v1193
        %v1198 = vpack.c.b16 %v1196, %v1195
        %v1202 = vsel %vm515, %v1184, 0
        %1204 = vmatpush.bf16.msra.mxu0 0
        %1205 = vmatpush.bf16.msra.mxu0 0
        %1206 = vmatpush.bf16.msra.mxu0 0
        %1207 = vmatpush.bf16.msra.mxu0 0
        %1208 = vmatpush.bf16.msra.mxu0 0
        %1209 = vmatpush.bf16.msra.mxu0 0
        %1210 = vmatpush.bf16.msra.mxu0 %v1198
        %1211 = vmatpush.bf16.msra.mxu0 %v1197
        %1212 = vmatmul.bf16.gmra.mxu0 %v1202
        %v1213 = vpop.f32.mrf.mxu0
        %v1214 = vadd.f32 0.0, %v1213
        %v1215 = vpop.f32.mrf.mxu0
        %1216 = vdwg.mxu0
        %1217 = vst.msk [vmem:[%s335] sm:$0xff] %vm515, %v1214
        %s1218 = sand.u32 %s224, 1
        %s1219 = scalar_lea.sflag [#allocation9], %s1218
        %s1220 = sand.u32 %s224, 1
        %s1221 = smul.addr %s1220, 8
        %s1222 = scalar_lea.vmem [#allocation8], %s1221
        // Predicated region
        $region73: #{grouped_query_attention.1} parent=51 // pred_check
          %p1223 = pneg %p234
        $region74: #{grouped_query_attention.1} parent=51 // pred_check_branch
          %1225 = sbr.rel (%p1223) target = $region76
        $region75: #{grouped_query_attention.1} parent=51 // pred_region
          %1227 = vsyncadd %s1219, 0
          %s1228 = smul.addr %s26, 2
          %s1229 = sadd.s32 %s27, %s1228
          %s1230 = smul.addr %s1229, 8
          %s1231 = scalar_lea.hbm %s8, %s1230
          %s1233 = sshll.u32 %s1222, 4
          %s1234 = int_to_ptr.vmem [resolvable:$true] %s1233
          %s1235 = sshll.u32 %s1231, 4
          %s1236 = int_to_ptr.hbm [resolvable:$true] %s1235
          %1238 = dma.vmem_to_hbm [thread:$0]  %s1234, 128, %s1236, %s1219
        $region76: #{grouped_query_attention.1} parent=51 // pred_fallthru
          _
      $region52: #{grouped_query_attention.1} parent=5 // pred_fallthru
        _
      %p1239 = scmp.le.s32.totalorder 2, %s17
      // Predicated region
      $region77: #{grouped_query_attention.1} parent=5 // pred_check
        %p1240 = pneg %p1239
      $region78: #{grouped_query_attention.1} parent=5 // pred_check_branch
        %1242 = sbr.rel (%p1240) target = $region80
      $region79: #{grouped_query_attention.1} parent=5 // pred_region
        %s1243 = ssub.s32 %s17, 2
        // Predicated region
        $region81: #{grouped_query_attention.1} parent=79 // pred_check
          %p1244 = pneg %p240
        $region82: #{grouped_query_attention.1} parent=79 // pred_check_branch
          %1246 = sbr.rel (%p1244) target = $region84
        $region83: #{grouped_query_attention.1} parent=79 // pred_region
          %s1247 = sand.u32 %s225, 1
          %s1248 = scalar_lea.sflag [#allocation9], %s1247
          %s1249 = sand.u32 %s225, 1
          %s1250 = smul.addr %s1249, 8
          %s1251 = scalar_lea.vmem [#allocation8], %s1250
          %1253 = dma.done %s1248, 128
        $region84: #{grouped_query_attention.1} parent=79 // pred_fallthru
          _
      $region80: #{grouped_query_attention.1} parent=5 // pred_fallthru
        _
    $region6: #{grouped_query_attention.1} parent=1 // loop_footer
      %s21 = sadd.s32 1, %s17
    $region7: #{grouped_query_attention.1} parent=1 // loop_footer_branch
      %16 = sbr.rel target = $region3
    $region8: #{grouped_query_attention.1} parent=1 // loop_exit
      _
    %1254 = vsyncpa [#allocation9], 1
    %s1255 = scalar_lea.sflag [#allocation9], 1
    %1256 = vsyncpa %s1255, 1

</llo_original>
